<compile_context>
chip_gen: v5e
topology: v5e:2x2
jax: 0.10.0
libtpu: 0.0.40
codegen_flags: <defaults>
</compile_context>

<pallas_src>
import functools

import jax
import jax.numpy as jnp
from jax.experimental import pallas as pl
from jax.experimental.pallas import tpu as pltpu

BN_EPS = 1e-5


# ----------------------------------------------------------------------------
# small helpers
# ----------------------------------------------------------------------------
def _apply_act(y, act):
    if act == 'relu':
        return jnp.maximum(y, 0.0)
    if act in ('swish', 'silu'):
        return y * jax.nn.sigmoid(y)
    if act == 'lrelu':
        return jnp.where(y >= 0, y, 0.1 * y)
    if act is None:
        return y
    raise ValueError(f'unsupported act: {act}')


def _pick_tile(total, max_tile=512):
    """Largest divisor of `total` that is a multiple of 8 and <= max_tile,
    falling back to the full extent (a full-dim block is always legal)."""
    if total <= max_tile:
        return total
    for t in range(max_tile, 7, -1):
        if total % t == 0 and t % 8 == 0:
            return t
    return total


def _bn_scale_bias(bn):
    scale = bn['gamma'] * jax.lax.rsqrt(bn['var'] + BN_EPS)
    bias = bn['beta'] - bn['mean'] * scale
    return scale, bias


def _fold_pointwise(p):
    """Fold eval-mode BN into a 1x1 conv: (Cin, Cout) weight, (1, Cout) bias."""
    w = p['w']                                  # (Cout, Cin, 1, 1)
    scale, bias = _bn_scale_bias(p['bn'])
    cout, cin = w.shape[0], w.shape[1]
    w2d = w.reshape(cout, cin) * scale[:, None]
    return jnp.transpose(w2d), bias.reshape(1, cout)


# ----------------------------------------------------------------------------
# Pallas kernels
# ----------------------------------------------------------------------------
def _pw_conv12_kernel(x_ref, w1_ref, b1_ref, w2_ref, b2_ref, o1_ref, o2_ref, *, act):
    # Fused conv1 + conv2 (both 1x1 conv + folded BN + act on the same x tile):
    #   x_ref: (tile_m, Cin); w*_ref: (Cin, Ch); b*_ref: (1, Ch)
    x = x_ref[...]
    z1 = jnp.dot(x, w1_ref[...], preferred_element_type=jnp.float32) + b1_ref[...]
    z2 = jnp.dot(x, w2_ref[...], preferred_element_type=jnp.float32) + b2_ref[...]
    o1_ref[...] = _apply_act(z1, act).astype(o1_ref.dtype)
    o2_ref[...] = _apply_act(z2, act).astype(o2_ref.dtype)


def _pool_sum2_kernel(y1_ref, y2_ref, o1_ref, o2_ref):
    # y*_ref: (tile_hw, Ch); o*_ref: (1, Ch) f32 accumulators, resident across hw axis.
    @pl.when(pl.program_id(1) == 0)
    def _():
        o1_ref[...] = jnp.zeros_like(o1_ref)
        o2_ref[...] = jnp.zeros_like(o2_ref)

    o1_ref[...] += jnp.sum(y1_ref[...].astype(jnp.float32), axis=0, keepdims=True)
    o2_ref[...] += jnp.sum(y2_ref[...].astype(jnp.float32), axis=0, keepdims=True)


def _gate_conv3_kernel(y1_ref, y2_ref, g1_ref, g2_ref, wa_ref, wb_ref, b_ref,
                       o_ref, *, act):
    # Fused EffectiveSE gate multiply + conv3 (1x1 conv + folded BN + act):
    #   conv3(cat([y1*g1, y2*g2])) == (y1*g1) @ W3[:Ch] + (y2*g2) @ W3[Ch:]
    y1 = y1_ref[...] * g1_ref[...]              # (tile_hw, Ch) * (1, Ch), input dtype
    y2 = y2_ref[...] * g2_ref[...]
    z = jnp.dot(y1, wa_ref[...], preferred_element_type=jnp.float32)
    z = z + jnp.dot(y2, wb_ref[...], preferred_element_type=jnp.float32)
    z = z + b_ref[...]
    o_ref[...] = _apply_act(z, act).astype(o_ref.dtype)


# ----------------------------------------------------------------------------
# Pallas wrappers
# ----------------------------------------------------------------------------
def _pw_conv12_bn_act(x_nhwc, w1, b1, w2, b2, act):
    """Fused conv1+conv2 (1x1 conv + BN + act) as one row-tiled Pallas matmul,
    reading each x tile from HBM once and producing two lane-dense outputs."""
    N, H, W, Cin = x_nhwc.shape
    Ch = w1.shape[1]
    M = N * H * W
    xm = x_nhwc.reshape(M, Cin)
    tile = _pick_tile(M)
    itemsize = x_nhwc.dtype.itemsize
    y1, y2 = pl.pallas_call(
        functools.partial(_pw_conv12_kernel, act=act),
        out_shape=(jax.ShapeDtypeStruct((M, Ch), x_nhwc.dtype),
                   jax.ShapeDtypeStruct((M, Ch), x_nhwc.dtype)),
        grid_spec=pltpu.PrefetchScalarGridSpec(
            num_scalar_prefetch=0,
            grid=(M // tile,),
            in_specs=[
                pl.BlockSpec((tile, Cin), lambda i: (i, 0)),
                pl.BlockSpec((Cin, Ch), lambda i: (0, 0)),
                pl.BlockSpec((1, Ch), lambda i: (0, 0)),
                pl.BlockSpec((Cin, Ch), lambda i: (0, 0)),
                pl.BlockSpec((1, Ch), lambda i: (0, 0)),
            ],
            out_specs=(pl.BlockSpec((tile, Ch), lambda i: (i, 0)),
                       pl.BlockSpec((tile, Ch), lambda i: (i, 0)))),
        compiler_params=pltpu.CompilerParams(
            dimension_semantics=("parallel",)),
        cost_estimate=pl.CostEstimate(
            flops=4 * M * Cin * Ch,
            transcendentals=0,
            bytes_accessed=(M * Cin + 2 * M * Ch) * itemsize
                           + 2 * (Cin + 1) * Ch * 4),
    )(xm, w1, b1, w2, b2)
    return y1.reshape(N, H, W, Ch), y2.reshape(N, H, W, Ch)


def _pool_sum2(y1_nlc, y2_nlc):
    """Per-sample per-channel sums of both branches in one tiled Pallas pass:
    (N, HW, Ch) x2 -> (N, Ch) x2, f32."""
    N, HW, Ch = y1_nlc.shape
    tile = _pick_tile(HW)
    itemsize = y1_nlc.dtype.itemsize
    s1, s2 = pl.pallas_call(
        _pool_sum2_kernel,
        out_shape=(jax.ShapeDtypeStruct((N, 1, Ch), jnp.float32),
                   jax.ShapeDtypeStruct((N, 1, Ch), jnp.float32)),
        grid_spec=pltpu.PrefetchScalarGridSpec(
            num_scalar_prefetch=0,
            grid=(N, HW // tile),
            in_specs=[pl.BlockSpec((None, tile, Ch), lambda n, h: (n, h, 0)),
                      pl.BlockSpec((None, tile, Ch), lambda n, h: (n, h, 0))],
            out_specs=(pl.BlockSpec((None, 1, Ch), lambda n, h: (n, 0, 0)),
                       pl.BlockSpec((None, 1, Ch), lambda n, h: (n, 0, 0)))),
        compiler_params=pltpu.CompilerParams(
            dimension_semantics=("parallel", "arbitrary")),
        cost_estimate=pl.CostEstimate(
            flops=2 * N * HW * Ch, transcendentals=0,
            bytes_accessed=2 * N * HW * Ch * itemsize + 2 * N * Ch * 4),
    )(y1_nlc, y2_nlc)
    return s1.reshape(N, Ch), s2.reshape(N, Ch)


def _gate_conv3(y1, y2, g1, g2, w3a, w3b, b3, act, out_dtype):
    """Fused EffectiveSE gate-multiply + conv3(1x1)+BN+act, HW-tiled, lane-dense out."""
    N, HW, Ch = y1.shape
    C2 = w3a.shape[1]
    tile = _pick_tile(HW)
    itemsize = y1.dtype.itemsize
    return pl.pallas_call(
        functools.partial(_gate_conv3_kernel, act=act),
        out_shape=jax.ShapeDtypeStruct((N, HW, C2), out_dtype),
        grid_spec=pltpu.PrefetchScalarGridSpec(
            num_scalar_prefetch=0,
            grid=(N, HW // tile),
            in_specs=[
                pl.BlockSpec((None, tile, Ch), lambda n, h: (n, h, 0)),
                pl.BlockSpec((None, tile, Ch), lambda n, h: (n, h, 0)),
                pl.BlockSpec((None, 1, Ch), lambda n, h: (n, 0, 0)),
                pl.BlockSpec((None, 1, Ch), lambda n, h: (n, 0, 0)),
                pl.BlockSpec((Ch, C2), lambda n, h: (0, 0)),
                pl.BlockSpec((Ch, C2), lambda n, h: (0, 0)),
                pl.BlockSpec((1, C2), lambda n, h: (0, 0)),
            ],
            out_specs=pl.BlockSpec((None, tile, C2), lambda n, h: (n, h, 0))),
        compiler_params=pltpu.CompilerParams(
            dimension_semantics=("parallel", "parallel")),
        cost_estimate=pl.CostEstimate(
            flops=4 * N * HW * Ch * C2,
            transcendentals=0,
            bytes_accessed=(2 * N * HW * Ch + N * HW * C2) * itemsize
                           + (2 * Ch + 1) * C2 * 4),
    )(y1, y2, g1, g2, w3a, w3b, b3)


# ----------------------------------------------------------------------------
# XLA pieces (spatial convolutions)
# ----------------------------------------------------------------------------
def _conv3x3_bn_act_xla(x_nhwc, w_oihw, bn, stride, act):
    # TODO(synk): 3x3 spatial convolutions are delegated to XLA's conv (NHWC); no dedicated Pallas conv kernel.
    scale, bias = _bn_scale_bias(bn)
    w_hwio = jnp.transpose(w_oihw, (2, 3, 1, 0)) * scale[None, None, None, :]
    y = jax.lax.conv_general_dilated(
        x_nhwc, w_hwio,
        window_strides=(stride, stride),
        padding=((1, 1), (1, 1)),
        dimension_numbers=('NHWC', 'HWIO', 'NHWC'),
        precision=jax.lax.Precision.HIGHEST)
    return _apply_act(y + bias, act)


def _basic_block(y, blk, act):
    # TODO(synk): block_fn is an external constructor arg in the spec; the standard PP-YOLO BasicBlock (two 3x3 ConvBNLayers + identity shortcut) is assumed.
    t = _conv3x3_bn_act_xla(y, blk['conv1_w'], blk['bn1'], 1, act)
    t = _conv3x3_bn_act_xla(t, blk['conv2_w'], blk['bn2'], 1, act)
    return y + t


# ----------------------------------------------------------------------------
# Full CSPResStage forward (NCHW in / NCHW out)
# ----------------------------------------------------------------------------
def csp_res_stage_forward(x_nchw, params, *, stride=1, act='relu'):
    # Single layout change for the entire stage: NCHW -> NHWC (channels on lanes).
    x = jnp.transpose(x_nchw, (0, 2, 3, 1))
    if stride == 2:
        x = _conv3x3_bn_act_xla(x, params['conv_down']['w'],
                                params['conv_down']['bn'], 2, act)
    N, H, W, _ = x.shape
    HW = H * W

    # conv1 + conv2 fused: one pass over x, two lane-dense branch outputs.
    w1, b1 = _fold_pointwise(params['conv1'])
    w2, b2 = _fold_pointwise(params['conv2'])
    y1, y2 = _pw_conv12_bn_act(x, w1, b1, w2, b2, act)        # (N, H, W, Ch) x2
    for blk in params['blocks']:
        y2 = _basic_block(y2, blk, act)

    ch = y1.shape[-1]
    cmid = 2 * ch
    y1f = y1.reshape(N, HW, ch)
    y2f = y2.reshape(N, HW, ch)

    # EffectiveSELayer: Pallas tiled pooling (both branches in one pass),
    # tiny fc + hardsigmoid in XLA.
    s1, s2 = _pool_sum2(y1f, y2f)
    mean = jnp.concatenate([s1, s2], axis=-1) * (1.0 / HW)    # (N, cmid)
    wfc = params['attn']['w'].reshape(cmid, cmid)
    se = jnp.dot(mean, wfc.T, precision=jax.lax.Precision.HIGHEST)
    se = se + params['attn']['b'][None, :]
    gate = jnp.clip(se * (1.0 / 6.0) + 0.5, 0.0, 1.0).astype(x.dtype)  # hardsigmoid
    g1 = gate[:, :ch].reshape(N, 1, ch)
    g2 = gate[:, ch:].reshape(N, 1, ch)

    # Fused gate multiply + conv3 (the channel concat is realised by splitting
    # conv3's folded weight, so cat([y1, y2]) is never written to HBM).
    w3, b3 = _fold_pointwise(params['conv3'])
    out = _gate_conv3(y1f, y2f, g1, g2, w3[:ch], w3[ch:], b3, act, x.dtype)
    c2 = w3.shape[1]
    out = out.reshape(N, H, W, c2)
    return jnp.transpose(out, (0, 3, 1, 2))                   # NHWC -> NCHW


# ----------------------------------------------------------------------------
# pure-JAX NCHW reference (mirrors the PyTorch module, eval-mode BN)
# ----------------------------------------------------------------------------
def _ref_conv_bn_act_nchw(x, w, bn, stride, padding, act):
    y = jax.lax.conv_general_dilated(
        x, w, (stride, stride), ((padding, padding), (padding, padding)),
        dimension_numbers=('NCHW', 'OIHW', 'NCHW'),
        precision=jax.lax.Precision.HIGHEST)
    scale, bias = _bn_scale_bias(bn)
    y = y * scale[None, :, None, None] + bias[None, :, None, None]
    return _apply_act(y, act)


def csp_res_stage_reference(x, params, *, stride=1, act='relu'):
    if stride == 2:
        x = _ref_conv_bn_act_nchw(x, params['conv_down']['w'],
                                  params['conv_down']['bn'], 2, 1, act)
    y1 = _ref_conv_bn_act_nchw(x, params['conv1']['w'], params['conv1']['bn'], 1, 0, act)
    y2 = _ref_conv_bn_act_nchw(x, params['conv2']['w'], params['conv2']['bn'], 1, 0, act)
    for blk in params['blocks']:
        t = _ref_conv_bn_act_nchw(y2, blk['conv1_w'], blk['bn1'], 1, 1, act)
        t = _ref_conv_bn_act_nchw(t, blk['conv2_w'], blk['bn2'], 1, 1, act)
        y2 = y2 + t
    y = jnp.concatenate([y1, y2], axis=1)
    cmid = y.shape[1]
    mean = jnp.mean(y, axis=(2, 3))
    wfc = params['attn']['w'].reshape(cmid, cmid)
    se = jnp.dot(mean, wfc.T, precision=jax.lax.Precision.HIGHEST)
    se = se + params['attn']['b'][None, :]
    gate = jnp.clip(se / 6.0 + 0.5, 0.0, 1.0)
    y = y * gate[:, :, None, None]
    return _ref_conv_bn_act_nchw(y, params['conv3']['w'], params['conv3']['bn'], 1, 0, act)


# ----------------------------------------------------------------------------
# parameter construction + test
# ----------------------------------------------------------------------------
def init_csp_res_stage_params(key, c1, c2, n, stride):
    ch_mid = (c1 + c2) // 2
    ch_half = ch_mid // 2
    keys = iter(jax.random.split(key, 16 + 6 * max(n, 1)))

    def conv_w(cout, cin, k):
        return jax.random.normal(next(keys), (cout, cin, k, k), jnp.float32) * 0.1

    def bn(c):
        k1, k2, k3, k4 = jax.random.split(next(keys), 4)
        return dict(gamma=jax.random.uniform(k1, (c,), jnp.float32, 0.5, 1.5),
                    beta=0.1 * jax.random.normal(k2, (c,), jnp.float32),
                    mean=0.1 * jax.random.normal(k3, (c,), jnp.float32),
                    var=jax.random.uniform(k4, (c,), jnp.float32, 0.5, 1.5))

    params = {}
    if stride == 2:
        params['conv_down'] = dict(w=conv_w(ch_mid, c1, 3), bn=bn(ch_mid))
    params['conv1'] = dict(w=conv_w(ch_half, ch_mid, 1), bn=bn(ch_half))
    params['conv2'] = dict(w=conv_w(ch_half, ch_mid, 1), bn=bn(ch_half))
    params['blocks'] = [dict(conv1_w=conv_w(ch_half, ch_half, 3), bn1=bn(ch_half),
                             conv2_w=conv_w(ch_half, ch_half, 3), bn2=bn(ch_half))
                        for _ in range(n)]
    params['attn'] = dict(w=conv_w(ch_mid, ch_mid, 1),
                          b=0.1 * jax.random.normal(next(keys), (ch_mid,), jnp.float32))
    params['conv3'] = dict(w=conv_w(c2, ch_mid, 1), bn=bn(c2))
    return params


if __name__ == "__main__":
    key = jax.random.PRNGKey(0)
    k_params, k_x = jax.random.split(key)

    # Small CSPResStage: c1=16, c2=32 -> ch_mid=24, one block, stride=2 (conv_down).
    N, C1, C2, H, W = 2, 16, 32, 16, 16
    n_blocks, stride, act = 1, 2, 'relu'

    params = init_csp_res_stage_params(k_params, C1, C2, n_blocks, stride)
    x = jax.random.normal(k_x, (N, C1, H, W), dtype=jnp.float32)

    fwd = jax.jit(functools.partial(csp_res_stage_forward, stride=stride, act=act))
    out = fwd(x, params)
    jax.block_until_ready(out)

    ref = csp_res_stage_reference(x, params, stride=stride, act=act)
    assert out.shape == ref.shape, (out.shape, ref.shape)
    max_err = float(jnp.max(jnp.abs(out - ref)))
    assert jnp.allclose(out, ref, atol=2e-3, rtol=2e-3), \
        f"mismatch vs reference (max abs err {max_err})"
    print("KERNEL_OK")
</pallas_src>

<mosaic_0001>
module attributes {stable_mosaic.version = 11 : i64} {
  func.func @_pw_conv12_kernel(%arg0: i32, %arg1: memref<128x24xf32, #tpu.memory_space<vmem>>, %arg2: memref<24x12xf32, #tpu.memory_space<vmem>>, %arg3: memref<1x12xf32, #tpu.memory_space<vmem>>, %arg4: memref<24x12xf32, #tpu.memory_space<vmem>>, %arg5: memref<1x12xf32, #tpu.memory_space<vmem>>, %arg6: memref<128x12xf32, #tpu.memory_space<vmem>>, %arg7: memref<128x12xf32, #tpu.memory_space<vmem>>) attributes {dimension_semantics = [#tpu.dimension_semantics<parallel>], iteration_bounds = array<i64: 1>, scalar_prefetch = 0 : i64, scratch_operands = 0 : i64, tpu.core_type = #tpu.core_type<tc>, window_params = [{transform_indices = @transform_0, window_bounds = array<i64: 128, 24>}, {pipeline_mode = #tpu.pipeline_mode<synchronous>, transform_indices = @transform_1, window_bounds = array<i64: 24, 12>}, {pipeline_mode = #tpu.pipeline_mode<synchronous>, transform_indices = @transform_2, window_bounds = array<i64: 1, 12>}, {pipeline_mode = #tpu.pipeline_mode<synchronous>, transform_indices = @transform_3, window_bounds = array<i64: 24, 12>}, {pipeline_mode = #tpu.pipeline_mode<synchronous>, transform_indices = @transform_4, window_bounds = array<i64: 1, 12>}, {transform_indices = @transform_5, window_bounds = array<i64: 128, 12>}, {transform_indices = @transform_6, window_bounds = array<i64: 128, 12>}]} {
    %c0 = arith.constant 0 : index
    %c0_0 = arith.constant 0 : index
    %0 = vector.load %arg1[%c0, %c0_0] : memref<128x24xf32, #tpu.memory_space<vmem>>, vector<128x24xf32>
    %c0_1 = arith.constant 0 : index
    %c0_2 = arith.constant 0 : index
    %1 = vector.load %arg2[%c0_1, %c0_2] : memref<24x12xf32, #tpu.memory_space<vmem>>, vector<24x12xf32>
    %cst = arith.constant dense<0.000000e+00> : vector<128x12xf32>
    %2 = tpu.matmul %0, %1, %cst {dimension_numbers = #tpu.dot_dimension_numbers<[1], [0], [0], [1], [0, 0, 1, 1], [], []>} : vector<128x24xf32>, vector<24x12xf32>, vector<128x12xf32> -> vector<128x12xf32>
    %c0_3 = arith.constant 0 : index
    %c0_4 = arith.constant 0 : index
    %3 = vector.load %arg3[%c0_3, %c0_4] : memref<1x12xf32, #tpu.memory_space<vmem>>, vector<1x12xf32>
    %4 = vector.broadcast %3 : vector<1x12xf32> to vector<128x12xf32>
    %5 = arith.addf %2, %4 : vector<128x12xf32>
    %c0_5 = arith.constant 0 : index
    %c0_6 = arith.constant 0 : index
    %6 = vector.load %arg4[%c0_5, %c0_6] : memref<24x12xf32, #tpu.memory_space<vmem>>, vector<24x12xf32>
    %cst_7 = arith.constant dense<0.000000e+00> : vector<128x12xf32>
    %7 = tpu.matmul %0, %6, %cst_7 {dimension_numbers = #tpu.dot_dimension_numbers<[1], [0], [0], [1], [0, 0, 1, 1], [], []>} : vector<128x24xf32>, vector<24x12xf32>, vector<128x12xf32> -> vector<128x12xf32>
    %c0_8 = arith.constant 0 : index
    %c0_9 = arith.constant 0 : index
    %8 = vector.load %arg5[%c0_8, %c0_9] : memref<1x12xf32, #tpu.memory_space<vmem>>, vector<1x12xf32>
    %9 = vector.broadcast %8 : vector<1x12xf32> to vector<128x12xf32>
    %10 = arith.addf %7, %9 : vector<128x12xf32>
    %cst_10 = arith.constant 0.000000e+00 : f32
    %11 = vector.broadcast %cst_10 : f32 to vector<128x12xf32>
    %12 = arith.maximumf %5, %11 : vector<128x12xf32>
    %c0_11 = arith.constant 0 : index
    %c0_12 = arith.constant 0 : index
    %13 = vector.load %arg6[%c0_11, %c0_12] : memref<128x12xf32, #tpu.memory_space<vmem>>, vector<128x12xf32>
    tpu.vector_store %arg6[%c0_11, %c0_12], %12 {strides = array<i32>} : memref<128x12xf32, #tpu.memory_space<vmem>>, vector<128x12xf32>,
    %cst_13 = arith.constant 0.000000e+00 : f32
    %14 = vector.broadcast %cst_13 : f32 to vector<128x12xf32>
    %15 = arith.maximumf %10, %14 : vector<128x12xf32>
    %c0_14 = arith.constant 0 : index
    %c0_15 = arith.constant 0 : index
    %16 = vector.load %arg7[%c0_14, %c0_15] : memref<128x12xf32, #tpu.memory_space<vmem>>, vector<128x12xf32>
    tpu.vector_store %arg7[%c0_14, %c0_15], %15 {strides = array<i32>} : memref<128x12xf32, #tpu.memory_space<vmem>>, vector<128x12xf32>,
    return
  }
  func.func @transform_0(%arg0: i32) -> (i32, i32) {
    %c0_i32 = arith.constant 0 : i32
    %c0_i32_0 = arith.constant 0 : i32
    return %arg0, %c0_i32 : i32, i32
  }
  func.func @transform_1(%arg0: i32) -> (i32, i32) {
    %c0_i32 = arith.constant 0 : i32
    %c0_i32_0 = arith.constant 0 : i32
    %c0_i32_1 = arith.constant 0 : i32
    return %c0_i32, %c0_i32_0 : i32, i32
  }
  func.func @transform_2(%arg0: i32) -> (i32, i32) {
    %c0_i32 = arith.constant 0 : i32
    %c0_i32_0 = arith.constant 0 : i32
    %c0_i32_1 = arith.constant 0 : i32
    return %c0_i32, %c0_i32_0 : i32, i32
  }
  func.func @transform_3(%arg0: i32) -> (i32, i32) {
    %c0_i32 = arith.constant 0 : i32
    %c0_i32_0 = arith.constant 0 : i32
    %c0_i32_1 = arith.constant 0 : i32
    return %c0_i32, %c0_i32_0 : i32, i32
  }
  func.func @transform_4(%arg0: i32) -> (i32, i32) {
    %c0_i32 = arith.constant 0 : i32
    %c0_i32_0 = arith.constant 0 : i32
    %c0_i32_1 = arith.constant 0 : i32
    return %c0_i32, %c0_i32_0 : i32, i32
  }
  func.func @transform_5(%arg0: i32) -> (i32, i32) {
    %c0_i32 = arith.constant 0 : i32
    %c0_i32_0 = arith.constant 0 : i32
    return %arg0, %c0_i32 : i32, i32
  }
  func.func @transform_6(%arg0: i32) -> (i32, i32) {
    %c0_i32 = arith.constant 0 : i32
    %c0_i32_0 = arith.constant 0 : i32
    return %arg0, %c0_i32 : i32, i32
  }
}

module attributes {stable_mosaic.version = 11 : i64} {
  func.func @_pool_sum2_kernel(%arg0: i32, %arg1: i32, %arg2: memref<1x64x12xf32, #tpu.memory_space<vmem>>, %arg3: memref<1x64x12xf32, #tpu.memory_space<vmem>>, %arg4: memref<1x1x12xf32, #tpu.memory_space<vmem>>, %arg5: memref<1x1x12xf32, #tpu.memory_space<vmem>>) attributes {dimension_semantics = [#tpu.dimension_semantics<parallel>, #tpu.dimension_semantics<arbitrary>], iteration_bounds = array<i64: 2, 1>, scalar_prefetch = 0 : i64, scratch_operands = 0 : i64, tpu.core_type = #tpu.core_type<tc>, window_params = [{transform_indices = @transform_0, window_bounds = array<i64: 1, 64, 12>}, {transform_indices = @transform_1, window_bounds = array<i64: 1, 64, 12>}, {transform_indices = @transform_2, window_bounds = array<i64: 1, 1, 12>}, {transform_indices = @transform_3, window_bounds = array<i64: 1, 1, 12>}]} {
    %c0_i32 = arith.constant 0 : i32
    %0 = arith.cmpi eq, %arg1, %c0_i32 : i32
    %1 = arith.extui %0 : i1 to i32
    %c0_i32_0 = arith.constant 0 : i32
    %2 = arith.cmpi ne, %1, %c0_i32_0 : i32
    scf.if %2 {
      %cst_19 = arith.constant 0.000000e+00 : f32
      %23 = vector.broadcast %cst_19 : f32 to vector<1x12xf32>
      %c0_20 = arith.constant 0 : index
      %c0_21 = arith.constant 0 : index
      %c0_22 = arith.constant 0 : index
      %24 = vector.load %arg4[%c0_20, %c0_21, %c0_22] : memref<1x1x12xf32, #tpu.memory_space<vmem>>, vector<1x1x12xf32>
      %25 = vector.shape_cast %24 : vector<1x1x12xf32> to vector<1x12xf32>
      %26 = vector.shape_cast %23 : vector<1x12xf32> to vector<1x1x12xf32>
      tpu.vector_store %arg4[%c0_20, %c0_21, %c0_22], %26 {strides = array<i32>} : memref<1x1x12xf32, #tpu.memory_space<vmem>>, vector<1x1x12xf32>,
      %cst_23 = arith.constant 0.000000e+00 : f32
      %27 = vector.broadcast %cst_23 : f32 to vector<1x12xf32>
      %c0_24 = arith.constant 0 : index
      %c0_25 = arith.constant 0 : index
      %c0_26 = arith.constant 0 : index
      %28 = vector.load %arg5[%c0_24, %c0_25, %c0_26] : memref<1x1x12xf32, #tpu.memory_space<vmem>>, vector<1x1x12xf32>
      %29 = vector.shape_cast %28 : vector<1x1x12xf32> to vector<1x12xf32>
      %30 = vector.shape_cast %27 : vector<1x12xf32> to vector<1x1x12xf32>
      tpu.vector_store %arg5[%c0_24, %c0_25, %c0_26], %30 {strides = array<i32>} : memref<1x1x12xf32, #tpu.memory_space<vmem>>, vector<1x1x12xf32>,
    } else {
    }
    %c0 = arith.constant 0 : index
    %c0_1 = arith.constant 0 : index
    %c0_2 = arith.constant 0 : index
    %3 = vector.load %arg4[%c0, %c0_1, %c0_2] : memref<1x1x12xf32, #tpu.memory_space<vmem>>, vector<1x1x12xf32>
    %4 = vector.shape_cast %3 : vector<1x1x12xf32> to vector<1x12xf32>
    %c0_3 = arith.constant 0 : index
    %c0_4 = arith.constant 0 : index
    %c0_5 = arith.constant 0 : index
    %5 = vector.load %arg2[%c0_3, %c0_4, %c0_5] : memref<1x64x12xf32, #tpu.memory_space<vmem>>, vector<1x64x12xf32>
    %6 = vector.shape_cast %5 : vector<1x64x12xf32> to vector<64x12xf32>
    %cst = arith.constant dense<0.000000e+00> : vector<12xf32>
    %7 = vector.multi_reduction <add>, %6, %cst [0] : vector<64x12xf32> to vector<12xf32>
    %8 = vector.shape_cast %7 : vector<12xf32> to vector<1x12xf32>
    %9 = arith.addf %4, %8 : vector<1x12xf32>
    %c0_6 = arith.constant 0 : index
    %c0_7 = arith.constant 0 : index
    %c0_8 = arith.constant 0 : index
    %10 = vector.load %arg4[%c0_6, %c0_7, %c0_8] : memref<1x1x12xf32, #tpu.memory_space<vmem>>, vector<1x1x12xf32>
    %11 = vector.shape_cast %10 : vector<1x1x12xf32> to vector<1x12xf32>
    %12 = vector.shape_cast %9 : vector<1x12xf32> to vector<1x1x12xf32>
    tpu.vector_store %arg4[%c0_6, %c0_7, %c0_8], %12 {strides = array<i32>} : memref<1x1x12xf32, #tpu.memory_space<vmem>>, vector<1x1x12xf32>,
    %c0_9 = arith.constant 0 : index
    %c0_10 = arith.constant 0 : index
    %c0_11 = arith.constant 0 : index
    %13 = vector.load %arg5[%c0_9, %c0_10, %c0_11] : memref<1x1x12xf32, #tpu.memory_space<vmem>>, vector<1x1x12xf32>
    %14 = vector.shape_cast %13 : vector<1x1x12xf32> to vector<1x12xf32>
    %c0_12 = arith.constant 0 : index
    %c0_13 = arith.constant 0 : index
    %c0_14 = arith.constant 0 : index
    %15 = vector.load %arg3[%c0_12, %c0_13, %c0_14] : memref<1x64x12xf32, #tpu.memory_space<vmem>>, vector<1x64x12xf32>
    %16 = vector.shape_cast %15 : vector<1x64x12xf32> to vector<64x12xf32>
    %cst_15 = arith.constant dense<0.000000e+00> : vector<12xf32>
    %17 = vector.multi_reduction <add>, %16, %cst_15 [0] : vector<64x12xf32> to vector<12xf32>
    %18 = vector.shape_cast %17 : vector<12xf32> to vector<1x12xf32>
    %19 = arith.addf %14, %18 : vector<1x12xf32>
    %c0_16 = arith.constant 0 : index
    %c0_17 = arith.constant 0 : index
    %c0_18 = arith.constant 0 : index
    %20 = vector.load %arg5[%c0_16, %c0_17, %c0_18] : memref<1x1x12xf32, #tpu.memory_space<vmem>>, vector<1x1x12xf32>
    %21 = vector.shape_cast %20 : vector<1x1x12xf32> to vector<1x12xf32>
    %22 = vector.shape_cast %19 : vector<1x12xf32> to vector<1x1x12xf32>
    tpu.vector_store %arg5[%c0_16, %c0_17, %c0_18], %22 {strides = array<i32>} : memref<1x1x12xf32, #tpu.memory_space<vmem>>, vector<1x1x12xf32>,
    return
  }
  func.func @transform_0(%arg0: i32, %arg1: i32) -> (i32, i32, i32) {
    %c0_i32 = arith.constant 0 : i32
    %c0_i32_0 = arith.constant 0 : i32
    return %arg0, %arg1, %c0_i32 : i32, i32, i32
  }
  func.func @transform_1(%arg0: i32, %arg1: i32) -> (i32, i32, i32) {
    %c0_i32 = arith.constant 0 : i32
    %c0_i32_0 = arith.constant 0 : i32
    return %arg0, %arg1, %c0_i32 : i32, i32, i32
  }
  func.func @transform_2(%arg0: i32, %arg1: i32) -> (i32, i32, i32) {
    %c0_i32 = arith.constant 0 : i32
    %c0_i32_0 = arith.constant 0 : i32
    %c0_i32_1 = arith.constant 0 : i32
    return %arg0, %c0_i32, %c0_i32_0 : i32, i32, i32
  }
  func.func @transform_3(%arg0: i32, %arg1: i32) -> (i32, i32, i32) {
    %c0_i32 = arith.constant 0 : i32
    %c0_i32_0 = arith.constant 0 : i32
    %c0_i32_1 = arith.constant 0 : i32
    return %arg0, %c0_i32, %c0_i32_0 : i32, i32, i32
  }
}

module attributes {stable_mosaic.version = 11 : i64} {
  func.func @_gate_conv3_kernel(%arg0: i32, %arg1: i32, %arg2: memref<1x64x12xf32, #tpu.memory_space<vmem>>, %arg3: memref<1x64x12xf32, #tpu.memory_space<vmem>>, %arg4: memref<1x1x12xf32, #tpu.memory_space<vmem>>, %arg5: memref<1x1x12xf32, #tpu.memory_space<vmem>>, %arg6: memref<12x32xf32, #tpu.memory_space<vmem>>, %arg7: memref<12x32xf32, #tpu.memory_space<vmem>>, %arg8: memref<1x32xf32, #tpu.memory_space<vmem>>, %arg9: memref<1x64x32xf32, #tpu.memory_space<vmem>>) attributes {dimension_semantics = [#tpu.dimension_semantics<parallel>, #tpu.dimension_semantics<parallel>], iteration_bounds = array<i64: 2, 1>, scalar_prefetch = 0 : i64, scratch_operands = 0 : i64, tpu.core_type = #tpu.core_type<tc>, window_params = [{transform_indices = @transform_0, window_bounds = array<i64: 1, 64, 12>}, {transform_indices = @transform_1, window_bounds = array<i64: 1, 64, 12>}, {transform_indices = @transform_2, window_bounds = array<i64: 1, 1, 12>}, {transform_indices = @transform_3, window_bounds = array<i64: 1, 1, 12>}, {pipeline_mode = #tpu.pipeline_mode<synchronous>, transform_indices = @transform_4, window_bounds = array<i64: 12, 32>}, {pipeline_mode = #tpu.pipeline_mode<synchronous>, transform_indices = @transform_5, window_bounds = array<i64: 12, 32>}, {pipeline_mode = #tpu.pipeline_mode<synchronous>, transform_indices = @transform_6, window_bounds = array<i64: 1, 32>}, {transform_indices = @transform_7, window_bounds = array<i64: 1, 64, 32>}]} {
    %c0 = arith.constant 0 : index
    %c0_0 = arith.constant 0 : index
    %c0_1 = arith.constant 0 : index
    %0 = vector.load %arg2[%c0, %c0_0, %c0_1] : memref<1x64x12xf32, #tpu.memory_space<vmem>>, vector<1x64x12xf32>
    %1 = vector.shape_cast %0 : vector<1x64x12xf32> to vector<64x12xf32>
    %c0_2 = arith.constant 0 : index
    %c0_3 = arith.constant 0 : index
    %c0_4 = arith.constant 0 : index
    %2 = vector.load %arg4[%c0_2, %c0_3, %c0_4] : memref<1x1x12xf32, #tpu.memory_space<vmem>>, vector<1x1x12xf32>
    %3 = vector.shape_cast %2 : vector<1x1x12xf32> to vector<1x12xf32>
    %4 = vector.broadcast %3 : vector<1x12xf32> to vector<64x12xf32>
    %5 = arith.mulf %1, %4 : vector<64x12xf32>
    %c0_5 = arith.constant 0 : index
    %c0_6 = arith.constant 0 : index
    %c0_7 = arith.constant 0 : index
    %6 = vector.load %arg3[%c0_5, %c0_6, %c0_7] : memref<1x64x12xf32, #tpu.memory_space<vmem>>, vector<1x64x12xf32>
    %7 = vector.shape_cast %6 : vector<1x64x12xf32> to vector<64x12xf32>
    %c0_8 = arith.constant 0 : index
    %c0_9 = arith.constant 0 : index
    %c0_10 = arith.constant 0 : index
    %8 = vector.load %arg5[%c0_8, %c0_9, %c0_10] : memref<1x1x12xf32, #tpu.memory_space<vmem>>, vector<1x1x12xf32>
    %9 = vector.shape_cast %8 : vector<1x1x12xf32> to vector<1x12xf32>
    %10 = vector.broadcast %9 : vector<1x12xf32> to vector<64x12xf32>
    %11 = arith.mulf %7, %10 : vector<64x12xf32>
    %c0_11 = arith.constant 0 : index
    %c0_12 = arith.constant 0 : index
    %12 = vector.load %arg6[%c0_11, %c0_12] : memref<12x32xf32, #tpu.memory_space<vmem>>, vector<12x32xf32>
    %cst = arith.constant dense<0.000000e+00> : vector<64x32xf32>
    %13 = tpu.matmul %5, %12, %cst {dimension_numbers = #tpu.dot_dimension_numbers<[1], [0], [0], [1], [0, 0, 1, 1], [], []>} : vector<64x12xf32>, vector<12x32xf32>, vector<64x32xf32> -> vector<64x32xf32>
    %c0_13 = arith.constant 0 : index
    %c0_14 = arith.constant 0 : index
    %14 = vector.load %arg7[%c0_13, %c0_14] : memref<12x32xf32, #tpu.memory_space<vmem>>, vector<12x32xf32>
    %cst_15 = arith.constant dense<0.000000e+00> : vector<64x32xf32>
    %15 = tpu.matmul %11, %14, %cst_15 {dimension_numbers = #tpu.dot_dimension_numbers<[1], [0], [0], [1], [0, 0, 1, 1], [], []>} : vector<64x12xf32>, vector<12x32xf32>, vector<64x32xf32> -> vector<64x32xf32>
    %16 = arith.addf %13, %15 : vector<64x32xf32>
    %c0_16 = arith.constant 0 : index
    %c0_17 = arith.constant 0 : index
    %17 = vector.load %arg8[%c0_16, %c0_17] : memref<1x32xf32, #tpu.memory_space<vmem>>, vector<1x32xf32>
    %18 = vector.broadcast %17 : vector<1x32xf32> to vector<64x32xf32>
    %19 = arith.addf %16, %18 : vector<64x32xf32>
    %cst_18 = arith.constant 0.000000e+00 : f32
    %20 = vector.broadcast %cst_18 : f32 to vector<64x32xf32>
    %21 = arith.maximumf %19, %20 : vector<64x32xf32>
    %c0_19 = arith.constant 0 : index
    %c0_20 = arith.constant 0 : index
    %c0_21 = arith.constant 0 : index
    %22 = vector.load %arg9[%c0_19, %c0_20, %c0_21] : memref<1x64x32xf32, #tpu.memory_space<vmem>>, vector<1x64x32xf32>
    %23 = vector.shape_cast %22 : vector<1x64x32xf32> to vector<64x32xf32>
    %24 = vector.shape_cast %21 : vector<64x32xf32> to vector<1x64x32xf32>
    tpu.vector_store %arg9[%c0_19, %c0_20, %c0_21], %24 {strides = array<i32>} : memref<1x64x32xf32, #tpu.memory_space<vmem>>, vector<1x64x32xf32>,
    return
  }
  func.func @transform_0(%arg0: i32, %arg1: i32) -> (i32, i32, i32) {
    %c0_i32 = arith.constant 0 : i32
    %c0_i32_0 = arith.constant 0 : i32
    return %arg0, %arg1, %c0_i32 : i32, i32, i32
  }
  func.func @transform_1(%arg0: i32, %arg1: i32) -> (i32, i32, i32) {
    %c0_i32 = arith.constant 0 : i32
    %c0_i32_0 = arith.constant 0 : i32
    return %arg0, %arg1, %c0_i32 : i32, i32, i32
  }
  func.func @transform_2(%arg0: i32, %arg1: i32) -> (i32, i32, i32) {
    %c0_i32 = arith.constant 0 : i32
    %c0_i32_0 = arith.constant 0 : i32
    %c0_i32_1 = arith.constant 0 : i32
    return %arg0, %c0_i32, %c0_i32_0 : i32, i32, i32
  }
  func.func @transform_3(%arg0: i32, %arg1: i32) -> (i32, i32, i32) {
    %c0_i32 = arith.constant 0 : i32
    %c0_i32_0 = arith.constant 0 : i32
    %c0_i32_1 = arith.constant 0 : i32
    return %arg0, %c0_i32, %c0_i32_0 : i32, i32, i32
  }
  func.func @transform_4(%arg0: i32, %arg1: i32) -> (i32, i32) {
    %c0_i32 = arith.constant 0 : i32
    %c0_i32_0 = arith.constant 0 : i32
    %c0_i32_1 = arith.constant 0 : i32
    return %c0_i32, %c0_i32_0 : i32, i32
  }
  func.func @transform_5(%arg0: i32, %arg1: i32) -> (i32, i32) {
    %c0_i32 = arith.constant 0 : i32
    %c0_i32_0 = arith.constant 0 : i32
    %c0_i32_1 = arith.constant 0 : i32
    return %c0_i32, %c0_i32_0 : i32, i32
  }
  func.func @transform_6(%arg0: i32, %arg1: i32) -> (i32, i32) {
    %c0_i32 = arith.constant 0 : i32
    %c0_i32_0 = arith.constant 0 : i32
    %c0_i32_1 = arith.constant 0 : i32
    return %c0_i32, %c0_i32_0 : i32, i32
  }
  func.func @transform_7(%arg0: i32, %arg1: i32) -> (i32, i32, i32) {
    %c0_i32 = arith.constant 0 : i32
    %c0_i32_0 = arith.constant 0 : i32
    return %arg0, %arg1, %c0_i32 : i32, i32, i32
  }
}

</mosaic_0001>

<llo_original>
// kernel: csp_res_stage_forward.3
$region0: #{csp_res_stage_forward.3}
  #allocation0 [shape = 'u32[]', space=smem, size = 0x4, offset = 0x4, fixed_abs, tag = 'smem constant byte address 0x4 - core index']
  #allocation1 [shape = 'u32[72,128]{1,0:T(1,128)}', space=vmem, size = 0x9000, scoped, tag = 'internal scratch']
  %s0 = inlined_call_operand.vmem [shape: f32[128,24], index: 0, kind: input, shape index: {}]
  %s1 = inlined_call_operand.vmem [shape: f32[24,12], index: 1, kind: input, shape index: {}]
  %s2 = inlined_call_operand.vmem [shape: f32[1,12], index: 2, kind: input, shape index: {}]
  %s3 = inlined_call_operand.vmem [shape: f32[24,12], index: 3, kind: input, shape index: {}]
  %s4 = inlined_call_operand.vmem [shape: f32[1,12], index: 4, kind: input, shape index: {}]
  %s5 = inlined_call_operand.vmem [shape: f32[128,12], index: 5, kind: output, shape index: {0}]
  %s6 = inlined_call_operand.vmem [shape: f32[128,12], index: 6, kind: output, shape index: {1}]
  %7 = xla_tuple %s5, %s6
  %s8 = sld [smem:[#allocation0]]
  $region38: #{csp_res_stage_forward.3} parent=0
    _
  %s10 = ssub.s32 1, %s8
  %s11 = scalar_select 0, %s10, %s8
  // Predicated region
  $region2: #{csp_res_stage_forward.3} parent=0 // pred_check
    _
  $region3: #{csp_res_stage_forward.3} parent=0 // pred_check_branch
    %13 = sbr.rel (0) target = $region5
  $region4: #{csp_res_stage_forward.3} parent=0 // pred_region
    _
  $region5: #{csp_res_stage_forward.3} parent=0 // pred_fallthru
    _
  // Predicated region
  $region6: #{csp_res_stage_forward.3} parent=0 // pred_check
    _
  $region7: #{csp_res_stage_forward.3} parent=0 // pred_check_branch
    %15 = sbr.rel (0) target = $region9
  $region8: #{csp_res_stage_forward.3} parent=0 // pred_region
    _
  $region9: #{csp_res_stage_forward.3} parent=0 // pred_fallthru
    _
  // Predicated region
  $region10: #{csp_res_stage_forward.3} parent=0 // pred_check
    _
  $region11: #{csp_res_stage_forward.3} parent=0 // pred_check_branch
    %17 = sbr.rel (0) target = $region13
  $region12: #{csp_res_stage_forward.3} parent=0 // pred_region
    _
  $region13: #{csp_res_stage_forward.3} parent=0 // pred_fallthru
    _
  // Predicated region
  $region14: #{csp_res_stage_forward.3} parent=0 // pred_check
    _
  $region15: #{csp_res_stage_forward.3} parent=0 // pred_check_branch
    %19 = sbr.rel (0) target = $region17
  $region16: #{csp_res_stage_forward.3} parent=0 // pred_region
    _
  $region17: #{csp_res_stage_forward.3} parent=0 // pred_fallthru
    _
  // Predicated region
  $region18: #{csp_res_stage_forward.3} parent=0 // pred_check
    _
  $region19: #{csp_res_stage_forward.3} parent=0 // pred_check_branch
    %21 = sbr.rel (0) target = $region21
  $region20: #{csp_res_stage_forward.3} parent=0 // pred_region
    _
  $region21: #{csp_res_stage_forward.3} parent=0 // pred_fallthru
    _
  %v22 = vld [vmem:[%s0] sm:$0xff]
  %v23 = vld [vmem:[%s0 + $0x8] sm:$0xff]
  %v24 = vld [vmem:[%s0 + $0x10] sm:$0xff]
  %v25 = vld [vmem:[%s0 + $0x18] sm:$0xff]
  %v26 = vld [vmem:[%s0 + $0x20] sm:$0xff]
  %v27 = vld [vmem:[%s0 + $0x28] sm:$0xff]
  %v28 = vld [vmem:[%s0 + $0x30] sm:$0xff]
  %v29 = vld [vmem:[%s0 + $0x38] sm:$0xff]
  %v30 = vld [vmem:[%s0 + $0x40] sm:$0xff]
  %v31 = vld [vmem:[%s0 + $0x48] sm:$0xff]
  %v32 = vld [vmem:[%s0 + $0x50] sm:$0xff]
  %v33 = vld [vmem:[%s0 + $0x58] sm:$0xff]
  %v34 = vld [vmem:[%s0 + $0x60] sm:$0xff]
  %v35 = vld [vmem:[%s0 + $0x68] sm:$0xff]
  %v36 = vld [vmem:[%s0 + $0x70] sm:$0xff]
  %v37 = vld [vmem:[%s0 + $0x78] sm:$0xff]
  %v38 = vld [vmem:[%s1] sm:$0xff]
  %v39 = vld [vmem:[%s1 + $0x8] sm:$0xff]
  %v40 = vld [vmem:[%s1 + $0x10] sm:$0xff]
  %v41 = vld [vmem:[%s2] sm:$0x1]
  %v43 = vperm.slane %v41, 0
  %vm45 = vcmask 195584
  %v47 = vsel %vm45, %v22, 0
  %v50 = vsel %vm45, %v23, 0
  %v53 = vsel %vm45, %v24, 0
  %v56 = vsel %vm45, %v25, 0
  %v59 = vsel %vm45, %v26, 0
  %v62 = vsel %vm45, %v27, 0
  %v65 = vsel %vm45, %v28, 0
  %v68 = vsel %vm45, %v29, 0
  %v71 = vsel %vm45, %v30, 0
  %v74 = vsel %vm45, %v31, 0
  %v77 = vsel %vm45, %v32, 0
  %v80 = vsel %vm45, %v33, 0
  %v83 = vsel %vm45, %v34, 0
  %v86 = vsel %vm45, %v35, 0
  %v89 = vsel %vm45, %v36, 0
  %v92 = vsel %vm45, %v37, 0
  %94 = vmatpush.msra.mxu0 0.0
  %95 = vmatpush.msra.mxu0 0.0
  %96 = vmatpush.msra.mxu0 0.0
  %97 = vmatpush.msra.mxu0 0.0
  %98 = vmatpush.msra.mxu0 0.0
  %99 = vmatpush.msra.mxu0 0.0
  %100 = vmatpush.msra.mxu0 0.0
  %101 = vmatpush.msra.mxu0 0.0
  %102 = vmatpush.msra.mxu0 0.0
  %103 = vmatpush.msra.mxu0 0.0
  %104 = vmatpush.msra.mxu0 0.0
  %105 = vmatpush.msra.mxu0 0.0
  %106 = vmatpush.msra.mxu0 0.0
  %107 = vmatpush.msra.mxu0 %v40
  %108 = vmatpush.msra.mxu0 %v39
  %109 = vmatpush.msra.mxu0 %v38
  %110 = vmatmul.f32.gmra.mxu0 %v47
  %v111 = vpop.f32.mrf.mxu0
  %v112 = vadd.f32 %v43, %v111
  %113 = vmatmul.f32.gmra.mxu0 %v50
  %v114 = vpop.f32.mrf.mxu0
  %v115 = vadd.f32 %v43, %v114
  %116 = vmatmul.f32.gmra.mxu0 %v53
  %v117 = vpop.f32.mrf.mxu0
  %v118 = vadd.f32 %v43, %v117
  %119 = vmatmul.f32.gmra.mxu0 %v56
  %v120 = vpop.f32.mrf.mxu0
  %v121 = vadd.f32 %v43, %v120
  %122 = vmatmul.f32.gmra.mxu0 %v59
  %v123 = vpop.f32.mrf.mxu0
  %v124 = vadd.f32 %v43, %v123
  %125 = vmatmul.f32.gmra.mxu0 %v62
  %v126 = vpop.f32.mrf.mxu0
  %v127 = vadd.f32 %v43, %v126
  %128 = vmatmul.f32.gmra.mxu0 %v65
  %v129 = vpop.f32.mrf.mxu0
  %v130 = vadd.f32 %v43, %v129
  %131 = vmatmul.f32.gmra.mxu0 %v68
  %v132 = vpop.f32.mrf.mxu0
  %v133 = vadd.f32 %v43, %v132
  %134 = vmatmul.f32.gmra.mxu0 %v71
  %v135 = vpop.f32.mrf.mxu0
  %v136 = vadd.f32 %v43, %v135
  %137 = vmatmul.f32.gmra.mxu0 %v74
  %v138 = vpop.f32.mrf.mxu0
  %v139 = vadd.f32 %v43, %v138
  %140 = vmatmul.f32.gmra.mxu0 %v77
  %v141 = vpop.f32.mrf.mxu0
  %v142 = vadd.f32 %v43, %v141
  %143 = vmatmul.f32.gmra.mxu0 %v80
  %v144 = vpop.f32.mrf.mxu0
  %v145 = vadd.f32 %v43, %v144
  %146 = vmatmul.f32.gmra.mxu0 %v83
  %v147 = vpop.f32.mrf.mxu0
  %v148 = vadd.f32 %v43, %v147
  %149 = vmatmul.f32.gmra.mxu0 %v86
  %v150 = vpop.f32.mrf.mxu0
  %v151 = vadd.f32 %v43, %v150
  %152 = vmatmul.f32.gmra.mxu0 %v89
  %v153 = vpop.f32.mrf.mxu0
  %v154 = vadd.f32 %v43, %v153
  %155 = vmatmul.f32.gmra.mxu0 %v92
  %v156 = vpop.f32.mrf.mxu0
  %v157 = vadd.f32 %v43, %v156
  %158 = vdwg.mxu0
  %v159 = vld [vmem:[%s3] sm:$0xff]
  %v160 = vld [vmem:[%s3 + $0x8] sm:$0xff]
  %v161 = vld [vmem:[%s3 + $0x10] sm:$0xff]
  %v162 = vld [vmem:[%s4] sm:$0x1]
  %v164 = vperm.slane %v162, 0
  %166 = vmatpush.msra.mxu0 0.0
  %167 = vmatpush.msra.mxu0 0.0
  %168 = vmatpush.msra.mxu0 0.0
  %169 = vmatpush.msra.mxu0 0.0
  %170 = vmatpush.msra.mxu0 0.0
  %171 = vmatpush.msra.mxu0 0.0
  %172 = vmatpush.msra.mxu0 0.0
  %173 = vmatpush.msra.mxu0 0.0
  %174 = vmatpush.msra.mxu0 0.0
  %175 = vmatpush.msra.mxu0 0.0
  %176 = vmatpush.msra.mxu0 0.0
  %177 = vmatpush.msra.mxu0 0.0
  %178 = vmatpush.msra.mxu0 0.0
  %179 = vmatpush.msra.mxu0 %v161
  %180 = vmatpush.msra.mxu0 %v160
  %181 = vmatpush.msra.mxu0 %v159
  %182 = vmatmul.f32.gmra.mxu0 %v47
  %v183 = vpop.f32.mrf.mxu0
  %v184 = vadd.f32 %v164, %v183
  %185 = vmatmul.f32.gmra.mxu0 %v50
  %v186 = vpop.f32.mrf.mxu0
  %v187 = vadd.f32 %v164, %v186
  %188 = vmatmul.f32.gmra.mxu0 %v53
  %v189 = vpop.f32.mrf.mxu0
  %v190 = vadd.f32 %v164, %v189
  %191 = vmatmul.f32.gmra.mxu0 %v56
  %v192 = vpop.f32.mrf.mxu0
  %v193 = vadd.f32 %v164, %v192
  %194 = vmatmul.f32.gmra.mxu0 %v59
  %v195 = vpop.f32.mrf.mxu0
  %v196 = vadd.f32 %v164, %v195
  %197 = vmatmul.f32.gmra.mxu0 %v62
  %v198 = vpop.f32.mrf.mxu0
  %v199 = vadd.f32 %v164, %v198
  %200 = vmatmul.f32.gmra.mxu0 %v65
  %v201 = vpop.f32.mrf.mxu0
  %v202 = vadd.f32 %v164, %v201
  %203 = vmatmul.f32.gmra.mxu0 %v68
  %v204 = vpop.f32.mrf.mxu0
  %v205 = vadd.f32 %v164, %v204
  %206 = vmatmul.f32.gmra.mxu0 %v71
  %v207 = vpop.f32.mrf.mxu0
  %v208 = vadd.f32 %v164, %v207
  %209 = vmatmul.f32.gmra.mxu0 %v74
  %v210 = vpop.f32.mrf.mxu0
  %v211 = vadd.f32 %v164, %v210
  %212 = vmatmul.f32.gmra.mxu0 %v77
  %v213 = vpop.f32.mrf.mxu0
  %v214 = vadd.f32 %v164, %v213
  %215 = vmatmul.f32.gmra.mxu0 %v80
  %v216 = vpop.f32.mrf.mxu0
  %v217 = vadd.f32 %v164, %v216
  %218 = vmatmul.f32.gmra.mxu0 %v83
  %v219 = vpop.f32.mrf.mxu0
  %v220 = vadd.f32 %v164, %v219
  %221 = vmatmul.f32.gmra.mxu0 %v86
  %v222 = vpop.f32.mrf.mxu0
  %v223 = vadd.f32 %v164, %v222
  %224 = vmatmul.f32.gmra.mxu0 %v89
  %v225 = vpop.f32.mrf.mxu0
  %v226 = vadd.f32 %v164, %v225
  %227 = vmatmul.f32.gmra.mxu0 %v92
  %v228 = vpop.f32.mrf.mxu0
  %v229 = vadd.f32 %v164, %v228
  %230 = vdwg.mxu0
  %v231 = vmax.f32 %v112, 0.0
  %v232 = vmax.f32 %v115, 0.0
  %v233 = vmax.f32 %v118, 0.0
  %v234 = vmax.f32 %v121, 0.0
  %v235 = vmax.f32 %v124, 0.0
  %v236 = vmax.f32 %v127, 0.0
  %v237 = vmax.f32 %v130, 0.0
  %v238 = vmax.f32 %v133, 0.0
  %v239 = vmax.f32 %v136, 0.0
  %v240 = vmax.f32 %v139, 0.0
  %v241 = vmax.f32 %v142, 0.0
  %v242 = vmax.f32 %v145, 0.0
  %v243 = vmax.f32 %v148, 0.0
  %v244 = vmax.f32 %v151, 0.0
  %v245 = vmax.f32 %v154, 0.0
  %v246 = vmax.f32 %v157, 0.0
  %vm247 = vcmask 97280
  %248 = vst.msk [vmem:[%s5] sm:$0xff] %vm247, %v231
  %249 = vst.msk [vmem:[%s5 + $0x8] sm:$0xff] %vm247, %v232
  %250 = vst.msk [vmem:[%s5 + $0x10] sm:$0xff] %vm247, %v233
  %251 = vst.msk [vmem:[%s5 + $0x18] sm:$0xff] %vm247, %v234
  %252 = vst.msk [vmem:[%s5 + $0x20] sm:$0xff] %vm247, %v235
  %253 = vst.msk [vmem:[%s5 + $0x28] sm:$0xff] %vm247, %v236
  %254 = vst.msk [vmem:[%s5 + $0x30] sm:$0xff] %vm247, %v237
  %255 = vst.msk [vmem:[%s5 + $0x38] sm:$0xff] %vm247, %v238
  %256 = vst.msk [vmem:[%s5 + $0x40] sm:$0xff] %vm247, %v239
  %257 = vst.msk [vmem:[%s5 + $0x48] sm:$0xff] %vm247, %v240
  %258 = vst.msk [vmem:[%s5 + $0x50] sm:$0xff] %vm247, %v241
  %259 = vst.msk [vmem:[%s5 + $0x58] sm:$0xff] %vm247, %v242
  %260 = vst.msk [vmem:[%s5 + $0x60] sm:$0xff] %vm247, %v243
  %261 = vst.msk [vmem:[%s5 + $0x68] sm:$0xff] %vm247, %v244
  %262 = vst.msk [vmem:[%s5 + $0x70] sm:$0xff] %vm247, %v245
  %263 = vst.msk [vmem:[%s5 + $0x78] sm:$0xff] %vm247, %v246
  %v264 = vmax.f32 %v184, 0.0
  %v265 = vmax.f32 %v187, 0.0
  %v266 = vmax.f32 %v190, 0.0
  %v267 = vmax.f32 %v193, 0.0
  %v268 = vmax.f32 %v196, 0.0
  %v269 = vmax.f32 %v199, 0.0
  %v270 = vmax.f32 %v202, 0.0
  %v271 = vmax.f32 %v205, 0.0
  %v272 = vmax.f32 %v208, 0.0
  %v273 = vmax.f32 %v211, 0.0
  %v274 = vmax.f32 %v214, 0.0
  %v275 = vmax.f32 %v217, 0.0
  %v276 = vmax.f32 %v220, 0.0
  %v277 = vmax.f32 %v223, 0.0
  %v278 = vmax.f32 %v226, 0.0
  %v279 = vmax.f32 %v229, 0.0
  %280 = vst.msk [vmem:[%s6] sm:$0xff] %vm247, %v264
  %281 = vst.msk [vmem:[%s6 + $0x8] sm:$0xff] %vm247, %v265
  %282 = vst.msk [vmem:[%s6 + $0x10] sm:$0xff] %vm247, %v266
  %283 = vst.msk [vmem:[%s6 + $0x18] sm:$0xff] %vm247, %v267
  %284 = vst.msk [vmem:[%s6 + $0x20] sm:$0xff] %vm247, %v268
  %285 = vst.msk [vmem:[%s6 + $0x28] sm:$0xff] %vm247, %v269
  %286 = vst.msk [vmem:[%s6 + $0x30] sm:$0xff] %vm247, %v270
  %287 = vst.msk [vmem:[%s6 + $0x38] sm:$0xff] %vm247, %v271
  %288 = vst.msk [vmem:[%s6 + $0x40] sm:$0xff] %vm247, %v272
  %289 = vst.msk [vmem:[%s6 + $0x48] sm:$0xff] %vm247, %v273
  %290 = vst.msk [vmem:[%s6 + $0x50] sm:$0xff] %vm247, %v274
  %291 = vst.msk [vmem:[%s6 + $0x58] sm:$0xff] %vm247, %v275
  %292 = vst.msk [vmem:[%s6 + $0x60] sm:$0xff] %vm247, %v276
  %293 = vst.msk [vmem:[%s6 + $0x68] sm:$0xff] %vm247, %v277
  %294 = vst.msk [vmem:[%s6 + $0x70] sm:$0xff] %vm247, %v278
  %295 = vst.msk [vmem:[%s6 + $0x78] sm:$0xff] %vm247, %v279
  // Predicated region
  $region22: #{csp_res_stage_forward.3} parent=0 // pred_check
    _
  $region23: #{csp_res_stage_forward.3} parent=0 // pred_check_branch
    %297 = sbr.rel (0) target = $region25
  $region24: #{csp_res_stage_forward.3} parent=0 // pred_region
    _
  $region25: #{csp_res_stage_forward.3} parent=0 // pred_fallthru
    _
  // Predicated region
  $region26: #{csp_res_stage_forward.3} parent=0 // pred_check
    _
  $region27: #{csp_res_stage_forward.3} parent=0 // pred_check_branch
    %299 = sbr.rel (0) target = $region29
  $region28: #{csp_res_stage_forward.3} parent=0 // pred_region
    _
  $region29: #{csp_res_stage_forward.3} parent=0 // pred_fallthru
    _
  // Predicated region
  $region30: #{csp_res_stage_forward.3} parent=0 // pred_check
    _
  $region31: #{csp_res_stage_forward.3} parent=0 // pred_check_branch
    %301 = sbr.rel (0) target = $region33
  $region32: #{csp_res_stage_forward.3} parent=0 // pred_region
    _
  $region33: #{csp_res_stage_forward.3} parent=0 // pred_fallthru
    _
  // Predicated region
  $region34: #{csp_res_stage_forward.3} parent=0 // pred_check
    _
  $region35: #{csp_res_stage_forward.3} parent=0 // pred_check_branch
    %303 = sbr.rel (0) target = $region37
  $region36: #{csp_res_stage_forward.3} parent=0 // pred_region
    _
  $region37: #{csp_res_stage_forward.3} parent=0 // pred_fallthru
    _

// kernel: csp_res_stage_forward.4
$region0: #{csp_res_stage_forward.4}
  #allocation0 [shape = 'u32[]', space=smem, size = 0x4, offset = 0x4, fixed_abs, tag = 'smem constant byte address 0x4 - core index']
  #allocation1 [shape = 'u32[72,128]{1,0:T(1,128)}', space=vmem, size = 0x9000, scoped, tag = 'internal scratch']
  %s0 = inlined_call_operand.vmem [shape: f32[2,64,12], index: 0, kind: input, shape index: {}]
  %s1 = inlined_call_operand.vmem [shape: f32[2,64,12], index: 1, kind: input, shape index: {}]
  %s2 = inlined_call_operand.vmem [shape: f32[2,1,12], index: 2, kind: output, shape index: {0}]
  %s3 = inlined_call_operand.vmem [shape: f32[2,1,12], index: 3, kind: output, shape index: {1}]
  %4 = xla_tuple %s2, %s3
  %s5 = sld [smem:[#allocation0]]
  $region53: #{csp_res_stage_forward.4} parent=0
    _
  %s7 = ssub.s32 1, %s5
  %s8 = scalar_select 0, %s7, %s5
  loop: start=0, step=1, limit=4
  $region2: #{csp_res_stage_forward.4} parent=0 // loop_pre_header
    _
  $region3: #{csp_res_stage_forward.4} parent=0 // loop_header
    %s10 = sphi 0, %s14
    %p11 = scmp.ge.s32.totalorder %s10, 4
    %s17 = sphi 0, %s29
    %s18 = sphi 0, %s25
    %s19 = sphi 0, %s17
    %s20 = sphi 0, %s18
    %s21 = sphi 0, %s19
    %s22 = sphi 0, %s20
    %s34 = sphi 0, %s36
    %s37 = sphi 0, %s34
    %s38 = sphi 0, %s37
    %s54 = sphi 0, %s38
    %s62 = sphi 0, %s64
    %s65 = sphi 0, %s62
    %s66 = sphi 0, %s65
    %s82 = sphi 0, %s66
    %s88 = sphi 0, %s90
    %s91 = sphi 0, %s88
    %s92 = sphi 0, %s91
    %s108 = sphi 0, %s92
    %s114 = sphi 0, %s116
    %s117 = sphi 0, %s114
    %s118 = sphi 0, %s117
    %s134 = sphi 0, %s118
  $region4: #{csp_res_stage_forward.4} parent=0 // loop_header_branch
    %13 = sbr.rel (%p11) target = $region8
  $region5: #{csp_res_stage_forward.4} parent=0 // loop_body
    %s15 = ssub.s32 %s10, 1
    %s16 = ssub.s32 %s10, 2
    %s23 = sadd.s32 1, %s18
    %p24 = scmp.ge.s32.totalorder %s23, 1
    %s25 = scalar_select %p24, 0, %s23
    %s26 = sadd.s32 1, %s17
    %s27 = scalar_select %p24, %s26, %s17
    %p28 = scmp.ge.s32.totalorder %s27, 2
    %s29 = scalar_select %p28, 0, %s27
    %s30 = ssub.s32 %s17, %s29
    %s31 = ssub.s32 %s18, %s25
    %s32 = sor.u32 %s30, %s31
    %p33 = scmp.eq.s32.totalorder %s32, 0
    %s35 = sadd.s32 %s34, 1
    %s36 = scalar_select %p33, %s34, %s35
    %p39 = pneg %p33
    %p40 = scmp.eq.s32.totalorder %s10, 1
    %p41 = por %p39, %p40
    %p42 = scmp.ne.s32.totalorder %s34, %s37
    %p43 = scmp.eq.s32.totalorder %s10, 0
    %p44 = por %p42, %p43
    %p45 = scmp.ne.s32.totalorder %s34, %s37
    %p46 = scmp.eq.s32.totalorder %s15, 1
    %p47 = por %p45, %p46
    %p48 = scmp.ne.s32.totalorder %s37, %s38
    %p49 = scmp.eq.s32.totalorder %s15, 0
    %p50 = por %p48, %p49
    %p51 = scmp.ne.s32.totalorder %s37, %s38
    %p52 = scmp.eq.s32.totalorder %s16, 1
    %p53 = por %p51, %p52
    %p55 = scmp.ne.s32.totalorder %s38, %s54
    %p56 = scmp.eq.s32.totalorder %s16, 0
    %p57 = por %p55, %p56
    %s58 = ssub.s32 %s17, %s29
    %s59 = ssub.s32 %s18, %s25
    %s60 = sor.u32 %s58, %s59
    %p61 = scmp.eq.s32.totalorder %s60, 0
    %s63 = sadd.s32 %s62, 1
    %s64 = scalar_select %p61, %s62, %s63
    %p67 = pneg %p61
    %p68 = scmp.eq.s32.totalorder %s10, 1
    %p69 = por %p67, %p68
    %p70 = scmp.ne.s32.totalorder %s62, %s65
    %p71 = scmp.eq.s32.totalorder %s10, 0
    %p72 = por %p70, %p71
    %p73 = scmp.ne.s32.totalorder %s62, %s65
    %p74 = scmp.eq.s32.totalorder %s15, 1
    %p75 = por %p73, %p74
    %p76 = scmp.ne.s32.totalorder %s65, %s66
    %p77 = scmp.eq.s32.totalorder %s15, 0
    %p78 = por %p76, %p77
    %p79 = scmp.ne.s32.totalorder %s65, %s66
    %p80 = scmp.eq.s32.totalorder %s16, 1
    %p81 = por %p79, %p80
    %p83 = scmp.ne.s32.totalorder %s66, %s82
    %p84 = scmp.eq.s32.totalorder %s16, 0
    %p85 = por %p83, %p84
    %s86 = ssub.s32 %s17, %s29
    %p87 = scmp.eq.s32.totalorder %s86, 0
    %s89 = sadd.s32 %s88, 1
    %s90 = scalar_select %p87, %s88, %s89
    %p93 = pneg %p87
    %p94 = scmp.eq.s32.totalorder %s10, 1
    %p95 = por %p93, %p94
    %p96 = scmp.ne.s32.totalorder %s88, %s91
    %p97 = scmp.eq.s32.totalorder %s10, 0
    %p98 = por %p96, %p97
    %p99 = scmp.ne.s32.totalorder %s88, %s91
    %p100 = scmp.eq.s32.totalorder %s15, 1
    %p101 = por %p99, %p100
    %p102 = scmp.ne.s32.totalorder %s91, %s92
    %p103 = scmp.eq.s32.totalorder %s15, 0
    %p104 = por %p102, %p103
    %p105 = scmp.ne.s32.totalorder %s91, %s92
    %p106 = scmp.eq.s32.totalorder %s16, 1
    %p107 = por %p105, %p106
    %p109 = scmp.ne.s32.totalorder %s92, %s108
    %p110 = scmp.eq.s32.totalorder %s16, 0
    %p111 = por %p109, %p110
    %s112 = ssub.s32 %s17, %s29
    %p113 = scmp.eq.s32.totalorder %s112, 0
    %s115 = sadd.s32 %s114, 1
    %s116 = scalar_select %p113, %s114, %s115
    %p119 = pneg %p113
    %p120 = scmp.eq.s32.totalorder %s10, 1
    %p121 = por %p119, %p120
    %p122 = scmp.ne.s32.totalorder %s114, %s117
    %p123 = scmp.eq.s32.totalorder %s10, 0
    %p124 = por %p122, %p123
    %p125 = scmp.ne.s32.totalorder %s114, %s117
    %p126 = scmp.eq.s32.totalorder %s15, 1
    %p127 = por %p125, %p126
    %p128 = scmp.ne.s32.totalorder %s117, %s118
    %p129 = scmp.eq.s32.totalorder %s15, 0
    %p130 = por %p128, %p129
    %p131 = scmp.ne.s32.totalorder %s117, %s118
    %p132 = scmp.eq.s32.totalorder %s16, 1
    %p133 = por %p131, %p132
    %p135 = scmp.ne.s32.totalorder %s118, %s134
    %p136 = scmp.eq.s32.totalorder %s16, 0
    %p137 = por %p135, %p136
    %p138 = scmp.le.s32.totalorder 1, %s10
    %p139 = scmp.lt.s32.totalorder %s10, 3
    %p140 = pnand %p138, %p139
    %p141 = pneg %p140
    // Predicated region
    $region9: #{csp_res_stage_forward.4} parent=5 // pred_check
      _
    $region10: #{csp_res_stage_forward.4} parent=5 // pred_check_branch
      %143 = sbr.rel (%p140) target = $region12
    $region11: #{csp_res_stage_forward.4} parent=5 // pred_region
      %s144 = ssub.s32 %s10, 1
    $region12: #{csp_res_stage_forward.4} parent=5 // pred_fallthru
      _
    %p145 = scmp.lt.s32.totalorder %s10, 2
    // Predicated region
    $region13: #{csp_res_stage_forward.4} parent=5 // pred_check
      %p146 = pneg %p145
    $region14: #{csp_res_stage_forward.4} parent=5 // pred_check_branch
      %148 = sbr.rel (%p146) target = $region16
    $region15: #{csp_res_stage_forward.4} parent=5 // pred_region
      // Predicated region
      $region17: #{csp_res_stage_forward.4} parent=15 // pred_check
        %p149 = pneg %p44
      $region18: #{csp_res_stage_forward.4} parent=15 // pred_check_branch
        %151 = sbr.rel (%p149) target = $region20
      $region19: #{csp_res_stage_forward.4} parent=15 // pred_region
        %s152 = smul.u32 8, %s18
        %p153 = scmp.lt.s32.totalorder %s17, 1
        %s154 = scalar_select %p153, %s17, 1
        %p155 = scmp.lt.s32.totalorder %s152, 7
        %s156 = scalar_select %p155, %s152, 7
        %s157 = smul.addr %s154, 8
        %s158 = sadd.s32 %s156, %s157
        %s159 = smul.addr %s158, 8
        %s160 = scalar_lea.vmem %s0, %s159
        %s161 = smul.u32 8, %s18
      $region20: #{csp_res_stage_forward.4} parent=15 // pred_fallthru
        _
      // Predicated region
      $region21: #{csp_res_stage_forward.4} parent=15 // pred_check
        %p162 = pneg %p72
      $region22: #{csp_res_stage_forward.4} parent=15 // pred_check_branch
        %164 = sbr.rel (%p162) target = $region24
      $region23: #{csp_res_stage_forward.4} parent=15 // pred_region
        %s165 = smul.u32 8, %s18
        %p166 = scmp.lt.s32.totalorder %s17, 1
        %s167 = scalar_select %p166, %s17, 1
        %p168 = scmp.lt.s32.totalorder %s165, 7
        %s169 = scalar_select %p168, %s165, 7
        %s170 = smul.addr %s167, 8
        %s171 = sadd.s32 %s169, %s170
        %s172 = smul.addr %s171, 8
        %s173 = scalar_lea.vmem %s1, %s172
        %s174 = smul.u32 8, %s18
      $region24: #{csp_res_stage_forward.4} parent=15 // pred_fallthru
        _
    $region16: #{csp_res_stage_forward.4} parent=5 // pred_fallthru
      _
    %p175 = scmp.le.s32.totalorder 1, %s10
    %p176 = scmp.lt.s32.totalorder %s10, 3
    %p177 = pnand %p175, %p176
    %p178 = pneg %p177
    // Predicated region
    $region25: #{csp_res_stage_forward.4} parent=5 // pred_check
      _
    $region26: #{csp_res_stage_forward.4} parent=5 // pred_check_branch
      %180 = sbr.rel (%p177) target = $region28
    $region27: #{csp_res_stage_forward.4} parent=5 // pred_region
      %s181 = ssub.s32 %s10, 1
      %s182 = smul.u32 8, %s20
      %p183 = scmp.lt.s32.totalorder %s19, 1
      %s184 = scalar_select %p183, %s19, 1
      %p185 = scmp.lt.s32.totalorder %s182, 7
      %s186 = scalar_select %p185, %s182, 7
      %s187 = smul.addr %s184, 8
      %s188 = sadd.s32 %s186, %s187
      %s189 = smul.addr %s188, 8
      %s190 = scalar_lea.vmem %s0, %s189
      %p191 = pneg %p50
      %p192 = pneg %p47
      %s193 = smul.u32 8, %s20
      %p194 = scmp.lt.s32.totalorder %s19, 1
      %s195 = scalar_select %p194, %s19, 1
      %p196 = scmp.lt.s32.totalorder %s193, 7
      %s197 = scalar_select %p196, %s193, 7
      %s198 = smul.addr %s195, 8
      %s199 = sadd.s32 %s197, %s198
      %s200 = smul.addr %s199, 8
      %s201 = scalar_lea.vmem %s1, %s200
      %p202 = pneg %p78
      %p203 = pneg %p75
      %p204 = pneg %p104
      %p205 = pneg %p101
      %p206 = scmp.lt.s32.totalorder %s19, 1
      %s207 = scalar_select %p206, %s19, 1
      %s208 = scalar_lea.vmem %s2, %s207
      %p209 = pneg %p130
      %p210 = pneg %p127
      %p211 = scmp.lt.s32.totalorder %s19, 1
      %s212 = scalar_select %p211, %s19, 1
      %s213 = scalar_lea.vmem %s3, %s212
      %s214 = smul.u32 8, %s20
      %p215 = scmp.lt.s32.totalorder %s19, 1
      %s216 = scalar_select %p215, %s19, 1
      %p217 = scmp.lt.s32.totalorder %s214, 7
      %s218 = scalar_select %p217, %s214, 7
      %s219 = smul.addr %s216, 8
      %s220 = sadd.s32 %s218, %s219
      %s221 = smul.addr %s220, 8
      %s222 = scalar_lea.vmem %s0, %s221
      %s223 = smul.u32 8, %s20
      %s224 = smul.u32 8, %s20
      %p225 = scmp.lt.s32.totalorder %s19, 1
      %s226 = scalar_select %p225, %s19, 1
      %p227 = scmp.lt.s32.totalorder %s224, 7
      %s228 = scalar_select %p227, %s224, 7
      %s229 = smul.addr %s226, 8
      %s230 = sadd.s32 %s228, %s229
      %s231 = smul.addr %s230, 8
      %s232 = scalar_lea.vmem %s1, %s231
      %s233 = smul.u32 8, %s20
      %p234 = scmp.lt.s32.totalorder %s19, 1
      %s235 = scalar_select %p234, %s19, 1
      %s236 = scalar_lea.vmem %s2, %s235
      %p237 = scmp.lt.s32.totalorder %s19, 1
      %s238 = scalar_select %p237, %s19, 1
      %s239 = scalar_lea.vmem %s3, %s238
      %p240 = scmp.eq.s32.totalorder %s20, 0
      // Predicated region
      $region29: #{csp_res_stage_forward.4} parent=27 // pred_check
        %p241 = pneg %p240
      $region30: #{csp_res_stage_forward.4} parent=27 // pred_check_branch
        %243 = sbr.rel (%p241) target = $region32
      $region31: #{csp_res_stage_forward.4} parent=27 // pred_region
        %vm244 = vcmask 90112
        %245 = vst.msk [vmem:[%s236] sm:$0x1] %vm244, 0.0
        %246 = vst.msk [vmem:[%s239] sm:$0x1] %vm244, 0.0
      $region32: #{csp_res_stage_forward.4} parent=27 // pred_fallthru
        _
      %v247 = vld [vmem:[%s236] sm:$0x1]
      %v248 = vld [vmem:[%s222] sm:$0xff]
      %v249 = vld [vmem:[%s222 + $0x8] sm:$0xff]
      %v250 = vld [vmem:[%s222 + $0x10] sm:$0xff]
      %v251 = vld [vmem:[%s222 + $0x18] sm:$0xff]
      %v252 = vld [vmem:[%s222 + $0x20] sm:$0xff]
      %v253 = vld [vmem:[%s222 + $0x28] sm:$0xff]
      %v254 = vld [vmem:[%s222 + $0x30] sm:$0xff]
      %v255 = vld [vmem:[%s222 + $0x38] sm:$0xff]
      %vm256 = vcmask 97280
      %v257 = vsel %vm256, %v248, 0.0
      %v258 = vsel %vm256, %v249, 0.0
      %v259 = vadd.f32 %v257, %v258
      %v260 = vsel %vm256, %v250, 0.0
      %v261 = vadd.f32 %v259, %v260
      %v262 = vsel %vm256, %v251, 0.0
      %v263 = vadd.f32 %v261, %v262
      %v264 = vsel %vm256, %v252, 0.0
      %v265 = vadd.f32 %v263, %v264
      %v266 = vsel %vm256, %v253, 0.0
      %v267 = vadd.f32 %v265, %v266
      %v268 = vsel %vm256, %v254, 0.0
      %v269 = vadd.f32 %v267, %v268
      %v270 = vsel %vm256, %v255, 0.0
      %v271 = vadd.f32 %v269, %v270
      %v272 = vrot.slane %v271, 4
      %v273 = vadd.f32 %v271, %v272
      %v274 = vrot.slane %v273, 2
      %v275 = vadd.f32 %v273, %v274
      %v276 = vrot.slane %v275, 1
      %v277 = vadd.f32 %v275, %v276
      %v278 = vadd.f32 %v247, %v277
      %vm279 = vcmask 90112
      %280 = vst.msk [vmem:[%s236] sm:$0x1] %vm279, %v278
      %v281 = vld [vmem:[%s239] sm:$0x1]
      %v282 = vld [vmem:[%s232] sm:$0xff]
      %v283 = vld [vmem:[%s232 + $0x8] sm:$0xff]
      %v284 = vld [vmem:[%s232 + $0x10] sm:$0xff]
      %v285 = vld [vmem:[%s232 + $0x18] sm:$0xff]
      %v286 = vld [vmem:[%s232 + $0x20] sm:$0xff]
      %v287 = vld [vmem:[%s232 + $0x28] sm:$0xff]
      %v288 = vld [vmem:[%s232 + $0x30] sm:$0xff]
      %v289 = vld [vmem:[%s232 + $0x38] sm:$0xff]
      %v290 = vsel %vm256, %v282, 0.0
      %v291 = vsel %vm256, %v283, 0.0
      %v292 = vadd.f32 %v290, %v291
      %v293 = vsel %vm256, %v284, 0.0
      %v294 = vadd.f32 %v292, %v293
      %v295 = vsel %vm256, %v285, 0.0
      %v296 = vadd.f32 %v294, %v295
      %v297 = vsel %vm256, %v286, 0.0
      %v298 = vadd.f32 %v296, %v297
      %v299 = vsel %vm256, %v287, 0.0
      %v300 = vadd.f32 %v298, %v299
      %v301 = vsel %vm256, %v288, 0.0
      %v302 = vadd.f32 %v300, %v301
      %v303 = vsel %vm256, %v289, 0.0
      %v304 = vadd.f32 %v302, %v303
      %v305 = vrot.slane %v304, 4
      %v306 = vadd.f32 %v304, %v305
      %v307 = vrot.slane %v306, 2
      %v308 = vadd.f32 %v306, %v307
      %v309 = vrot.slane %v308, 1
      %v310 = vadd.f32 %v308, %v309
      %v311 = vadd.f32 %v281, %v310
      %312 = vst.msk [vmem:[%s239] sm:$0x1] %vm279, %v311
      %p313 = scmp.lt.s32.totalorder %s19, 1
      %s314 = scalar_select %p313, %s19, 1
      %s315 = scalar_lea.vmem %s2, %s314
      %p316 = scmp.lt.s32.totalorder %s19, 1
      %s317 = scalar_select %p316, %s19, 1
      %s318 = scalar_lea.vmem %s3, %s317
      // Predicated region
      $region33: #{csp_res_stage_forward.4} parent=27 // pred_check
        %p319 = pneg %p101
      $region34: #{csp_res_stage_forward.4} parent=27 // pred_check_branch
        %321 = sbr.rel (%p319) target = $region36
      $region35: #{csp_res_stage_forward.4} parent=27 // pred_region
        _
      $region36: #{csp_res_stage_forward.4} parent=27 // pred_fallthru
        _
      // Predicated region
      $region37: #{csp_res_stage_forward.4} parent=27 // pred_check
        %p322 = pneg %p127
      $region38: #{csp_res_stage_forward.4} parent=27 // pred_check_branch
        %324 = sbr.rel (%p322) target = $region40
      $region39: #{csp_res_stage_forward.4} parent=27 // pred_region
        _
      $region40: #{csp_res_stage_forward.4} parent=27 // pred_fallthru
        _
    $region28: #{csp_res_stage_forward.4} parent=5 // pred_fallthru
      _
    %p325 = scmp.le.s32.totalorder 2, %s10
    // Predicated region
    $region41: #{csp_res_stage_forward.4} parent=5 // pred_check
      %p326 = pneg %p325
    $region42: #{csp_res_stage_forward.4} parent=5 // pred_check_branch
      %328 = sbr.rel (%p326) target = $region44
    $region43: #{csp_res_stage_forward.4} parent=5 // pred_region
      %s329 = ssub.s32 %s10, 2
      // Predicated region
      $region45: #{csp_res_stage_forward.4} parent=43 // pred_check
        %p330 = pneg %p107
      $region46: #{csp_res_stage_forward.4} parent=43 // pred_check_branch
        %332 = sbr.rel (%p330) target = $region48
      $region47: #{csp_res_stage_forward.4} parent=43 // pred_region
        %p333 = scmp.lt.s32.totalorder %s21, 1
        %s334 = scalar_select %p333, %s21, 1
        %s335 = scalar_lea.vmem %s2, %s334
      $region48: #{csp_res_stage_forward.4} parent=43 // pred_fallthru
        _
      // Predicated region
      $region49: #{csp_res_stage_forward.4} parent=43 // pred_check
        %p336 = pneg %p133
      $region50: #{csp_res_stage_forward.4} parent=43 // pred_check_branch
        %338 = sbr.rel (%p336) target = $region52
      $region51: #{csp_res_stage_forward.4} parent=43 // pred_region
        %p339 = scmp.lt.s32.totalorder %s21, 1
        %s340 = scalar_select %p339, %s21, 1
        %s341 = scalar_lea.vmem %s3, %s340
      $region52: #{csp_res_stage_forward.4} parent=43 // pred_fallthru
        _
    $region44: #{csp_res_stage_forward.4} parent=5 // pred_fallthru
      _
  $region6: #{csp_res_stage_forward.4} parent=0 // loop_footer
    %s14 = sadd.s32 1, %s10
  $region7: #{csp_res_stage_forward.4} parent=0 // loop_footer_branch
    %9 = sbr.rel target = $region3
  $region8: #{csp_res_stage_forward.4} parent=0 // loop_exit
    _

// kernel: csp_res_stage_forward.5
$region0: #{csp_res_stage_forward.5}
  #allocation0 [shape = 'u32[]', space=smem, size = 0x4, offset = 0x4, fixed_abs, tag = 'smem constant byte address 0x4 - core index']
  #allocation1 [shape = 'u32[72,128]{1,0:T(1,128)}', space=vmem, size = 0x9000, scoped, tag = 'internal scratch']
  %s0 = inlined_call_operand.vmem [shape: f32[2,64,12], index: 0, kind: input, shape index: {}]
  %s1 = inlined_call_operand.vmem [shape: f32[2,64,12], index: 1, kind: input, shape index: {}]
  %s2 = inlined_call_operand.vmem [shape: f32[2,1,12], index: 2, kind: input, shape index: {}]
  %s3 = inlined_call_operand.vmem [shape: f32[2,1,12], index: 3, kind: input, shape index: {}]
  %s4 = inlined_call_operand.vmem [shape: f32[12,32], index: 4, kind: input, shape index: {}]
  %s5 = inlined_call_operand.vmem [shape: f32[12,32], index: 5, kind: input, shape index: {}]
  %s6 = inlined_call_operand.vmem [shape: f32[1,32], index: 6, kind: input, shape index: {}]
  %s7 = inlined_call_operand.hbm [shape: f32[2,64,32], index: 7, kind: output, shape index: {}]
  %s8 = sld [smem:[#allocation0]]
  $region61: #{csp_res_stage_forward.5} parent=0
    _
  %s10 = ssub.s32 1, %s8
  %s11 = scalar_select 0, %s10, %s8
  $region1: #{csp_res_stage_forward.5} parent=0
    #allocation2 [shape = 'u8[65536]{0}', space=vmem, size = 0x10000, scoped, tag = 'output window, operand 0']
    #allocation3 [shape = 's32[2]{0}', space=sflag, size = 0x8, scoped, tag = 'scoped memory for csp_res_stage_forward.5']
    %12 = vsyncpa [#allocation3], 0
    %s13 = scalar_lea.sflag [#allocation3], 1
    %14 = vsyncpa %s13, 0
    loop: start=0, step=1, limit=4
    $region2: #{csp_res_stage_forward.5} parent=1 // loop_pre_header
      _
    $region3: #{csp_res_stage_forward.5} parent=1 // loop_header
      %s16 = sphi 0, %s20
      %p17 = scmp.ge.s32.totalorder %s16, 4
      %s23 = sphi 0, %s35
      %s24 = sphi 0, %s31
      %s25 = sphi 0, %s23
      %s26 = sphi 0, %s24
      %s27 = sphi 0, %s25
      %s28 = sphi 0, %s26
      %s40 = sphi 0, %s42
      %s43 = sphi 0, %s40
      %s44 = sphi 0, %s43
      %s60 = sphi 0, %s44
      %s68 = sphi 0, %s70
      %s71 = sphi 0, %s68
      %s72 = sphi 0, %s71
      %s88 = sphi 0, %s72
      %s94 = sphi 0, %s96
      %s97 = sphi 0, %s94
      %s98 = sphi 0, %s97
      %s114 = sphi 0, %s98
      %s120 = sphi 0, %s122
      %s123 = sphi 0, %s120
      %s124 = sphi 0, %s123
      %s140 = sphi 0, %s124
      %s144 = sphi 0, %s144
      %s146 = sphi 0, %s144
      %s147 = sphi 0, %s146
      %s161 = sphi 0, %s147
      %s165 = sphi 0, %s165
      %s167 = sphi 0, %s165
      %s168 = sphi 0, %s167
      %s182 = sphi 0, %s168
      %s186 = sphi 0, %s186
      %s188 = sphi 0, %s186
      %s189 = sphi 0, %s188
      %s203 = sphi 0, %s189
      %s211 = sphi 0, %s213
      %s214 = sphi 0, %s211
      %s215 = sphi 0, %s214
      %s231 = sphi 0, %s215
    $region4: #{csp_res_stage_forward.5} parent=1 // loop_header_branch
      %19 = sbr.rel (%p17) target = $region8
    $region5: #{csp_res_stage_forward.5} parent=1 // loop_body
      %s21 = ssub.s32 %s16, 1
      %s22 = ssub.s32 %s16, 2
      %s29 = sadd.s32 1, %s24
      %p30 = scmp.ge.s32.totalorder %s29, 1
      %s31 = scalar_select %p30, 0, %s29
      %s32 = sadd.s32 1, %s23
      %s33 = scalar_select %p30, %s32, %s23
      %p34 = scmp.ge.s32.totalorder %s33, 2
      %s35 = scalar_select %p34, 0, %s33
      %s36 = ssub.s32 %s23, %s35
      %s37 = ssub.s32 %s24, %s31
      %s38 = sor.u32 %s36, %s37
      %p39 = scmp.eq.s32.totalorder %s38, 0
      %s41 = sadd.s32 %s40, 1
      %s42 = scalar_select %p39, %s40, %s41
      %p45 = pneg %p39
      %p46 = scmp.eq.s32.totalorder %s16, 1
      %p47 = por %p45, %p46
      %p48 = scmp.ne.s32.totalorder %s40, %s43
      %p49 = scmp.eq.s32.totalorder %s16, 0
      %p50 = por %p48, %p49
      %p51 = scmp.ne.s32.totalorder %s40, %s43
      %p52 = scmp.eq.s32.totalorder %s21, 1
      %p53 = por %p51, %p52
      %p54 = scmp.ne.s32.totalorder %s43, %s44
      %p55 = scmp.eq.s32.totalorder %s21, 0
      %p56 = por %p54, %p55
      %p57 = scmp.ne.s32.totalorder %s43, %s44
      %p58 = scmp.eq.s32.totalorder %s22, 1
      %p59 = por %p57, %p58
      %p61 = scmp.ne.s32.totalorder %s44, %s60
      %p62 = scmp.eq.s32.totalorder %s22, 0
      %p63 = por %p61, %p62
      %s64 = ssub.s32 %s23, %s35
      %s65 = ssub.s32 %s24, %s31
      %s66 = sor.u32 %s64, %s65
      %p67 = scmp.eq.s32.totalorder %s66, 0
      %s69 = sadd.s32 %s68, 1
      %s70 = scalar_select %p67, %s68, %s69
      %p73 = pneg %p67
      %p74 = scmp.eq.s32.totalorder %s16, 1
      %p75 = por %p73, %p74
      %p76 = scmp.ne.s32.totalorder %s68, %s71
      %p77 = scmp.eq.s32.totalorder %s16, 0
      %p78 = por %p76, %p77
      %p79 = scmp.ne.s32.totalorder %s68, %s71
      %p80 = scmp.eq.s32.totalorder %s21, 1
      %p81 = por %p79, %p80
      %p82 = scmp.ne.s32.totalorder %s71, %s72
      %p83 = scmp.eq.s32.totalorder %s21, 0
      %p84 = por %p82, %p83
      %p85 = scmp.ne.s32.totalorder %s71, %s72
      %p86 = scmp.eq.s32.totalorder %s22, 1
      %p87 = por %p85, %p86
      %p89 = scmp.ne.s32.totalorder %s72, %s88
      %p90 = scmp.eq.s32.totalorder %s22, 0
      %p91 = por %p89, %p90
      %s92 = ssub.s32 %s23, %s35
      %p93 = scmp.eq.s32.totalorder %s92, 0
      %s95 = sadd.s32 %s94, 1
      %s96 = scalar_select %p93, %s94, %s95
      %p99 = pneg %p93
      %p100 = scmp.eq.s32.totalorder %s16, 1
      %p101 = por %p99, %p100
      %p102 = scmp.ne.s32.totalorder %s94, %s97
      %p103 = scmp.eq.s32.totalorder %s16, 0
      %p104 = por %p102, %p103
      %p105 = scmp.ne.s32.totalorder %s94, %s97
      %p106 = scmp.eq.s32.totalorder %s21, 1
      %p107 = por %p105, %p106
      %p108 = scmp.ne.s32.totalorder %s97, %s98
      %p109 = scmp.eq.s32.totalorder %s21, 0
      %p110 = por %p108, %p109
      %p111 = scmp.ne.s32.totalorder %s97, %s98
      %p112 = scmp.eq.s32.totalorder %s22, 1
      %p113 = por %p111, %p112
      %p115 = scmp.ne.s32.totalorder %s98, %s114
      %p116 = scmp.eq.s32.totalorder %s22, 0
      %p117 = por %p115, %p116
      %s118 = ssub.s32 %s23, %s35
      %p119 = scmp.eq.s32.totalorder %s118, 0
      %s121 = sadd.s32 %s120, 1
      %s122 = scalar_select %p119, %s120, %s121
      %p125 = pneg %p119
      %p126 = scmp.eq.s32.totalorder %s16, 1
      %p127 = por %p125, %p126
      %p128 = scmp.ne.s32.totalorder %s120, %s123
      %p129 = scmp.eq.s32.totalorder %s16, 0
      %p130 = por %p128, %p129
      %p131 = scmp.ne.s32.totalorder %s120, %s123
      %p132 = scmp.eq.s32.totalorder %s21, 1
      %p133 = por %p131, %p132
      %p134 = scmp.ne.s32.totalorder %s123, %s124
      %p135 = scmp.eq.s32.totalorder %s21, 0
      %p136 = por %p134, %p135
      %p137 = scmp.ne.s32.totalorder %s123, %s124
      %p138 = scmp.eq.s32.totalorder %s22, 1
      %p139 = por %p137, %p138
      %p141 = scmp.ne.s32.totalorder %s124, %s140
      %p142 = scmp.eq.s32.totalorder %s22, 0
      %p143 = por %p141, %p142
      %s145 = sadd.s32 %s144, 1
      %p148 = scmp.eq.s32.totalorder %s16, 1
      %p149 = scmp.ne.s32.totalorder %s144, %s146
      %p150 = scmp.eq.s32.totalorder %s16, 0
      %p151 = por %p149, %p150
      %p152 = scmp.ne.s32.totalorder %s144, %s146
      %p153 = scmp.eq.s32.totalorder %s21, 1
      %p154 = por %p152, %p153
      %p155 = scmp.ne.s32.totalorder %s146, %s147
      %p156 = scmp.eq.s32.totalorder %s21, 0
      %p157 = por %p155, %p156
      %p158 = scmp.ne.s32.totalorder %s146, %s147
      %p159 = scmp.eq.s32.totalorder %s22, 1
      %p160 = por %p158, %p159
      %p162 = scmp.ne.s32.totalorder %s147, %s161
      %p163 = scmp.eq.s32.totalorder %s22, 0
      %p164 = por %p162, %p163
      %s166 = sadd.s32 %s165, 1
      %p169 = scmp.eq.s32.totalorder %s16, 1
      %p170 = scmp.ne.s32.totalorder %s165, %s167
      %p171 = scmp.eq.s32.totalorder %s16, 0
      %p172 = por %p170, %p171
      %p173 = scmp.ne.s32.totalorder %s165, %s167
      %p174 = scmp.eq.s32.totalorder %s21, 1
      %p175 = por %p173, %p174
      %p176 = scmp.ne.s32.totalorder %s167, %s168
      %p177 = scmp.eq.s32.totalorder %s21, 0
      %p178 = por %p176, %p177
      %p179 = scmp.ne.s32.totalorder %s167, %s168
      %p180 = scmp.eq.s32.totalorder %s22, 1
      %p181 = por %p179, %p180
      %p183 = scmp.ne.s32.totalorder %s168, %s182
      %p184 = scmp.eq.s32.totalorder %s22, 0
      %p185 = por %p183, %p184
      %s187 = sadd.s32 %s186, 1
      %p190 = scmp.eq.s32.totalorder %s16, 1
      %p191 = scmp.ne.s32.totalorder %s186, %s188
      %p192 = scmp.eq.s32.totalorder %s16, 0
      %p193 = por %p191, %p192
      %p194 = scmp.ne.s32.totalorder %s186, %s188
      %p195 = scmp.eq.s32.totalorder %s21, 1
      %p196 = por %p194, %p195
      %p197 = scmp.ne.s32.totalorder %s188, %s189
      %p198 = scmp.eq.s32.totalorder %s21, 0
      %p199 = por %p197, %p198
      %p200 = scmp.ne.s32.totalorder %s188, %s189
      %p201 = scmp.eq.s32.totalorder %s22, 1
      %p202 = por %p200, %p201
      %p204 = scmp.ne.s32.totalorder %s189, %s203
      %p205 = scmp.eq.s32.totalorder %s22, 0
      %p206 = por %p204, %p205
      %s207 = ssub.s32 %s23, %s35
      %s208 = ssub.s32 %s24, %s31
      %s209 = sor.u32 %s207, %s208
      %p210 = scmp.eq.s32.totalorder %s209, 0
      %s212 = sadd.s32 %s211, 1
      %s213 = scalar_select %p210, %s211, %s212
      %p216 = pneg %p210
      %p217 = scmp.eq.s32.totalorder %s16, 1
      %p218 = por %p216, %p217
      %p219 = scmp.ne.s32.totalorder %s211, %s214
      %p220 = scmp.eq.s32.totalorder %s16, 0
      %p221 = por %p219, %p220
      %p222 = scmp.ne.s32.totalorder %s211, %s214
      %p223 = scmp.eq.s32.totalorder %s21, 1
      %p224 = por %p222, %p223
      %p225 = scmp.ne.s32.totalorder %s214, %s215
      %p226 = scmp.eq.s32.totalorder %s21, 0
      %p227 = por %p225, %p226
      %p228 = scmp.ne.s32.totalorder %s214, %s215
      %p229 = scmp.eq.s32.totalorder %s22, 1
      %p230 = por %p228, %p229
      %p232 = scmp.ne.s32.totalorder %s215, %s231
      %p233 = scmp.eq.s32.totalorder %s22, 0
      %p234 = por %p232, %p233
      %p235 = scmp.le.s32.totalorder 1, %s16
      %p236 = scmp.lt.s32.totalorder %s16, 3
      %p237 = pnand %p235, %p236
      %p238 = pneg %p237
      // Predicated region
      $region9: #{csp_res_stage_forward.5} parent=5 // pred_check
        _
      $region10: #{csp_res_stage_forward.5} parent=5 // pred_check_branch
        %240 = sbr.rel (%p237) target = $region12
      $region11: #{csp_res_stage_forward.5} parent=5 // pred_region
        %s241 = ssub.s32 %s16, 1
        // Predicated region
        $region13: #{csp_res_stage_forward.5} parent=11 // pred_check
          %p242 = pneg %p157
        $region14: #{csp_res_stage_forward.5} parent=11 // pred_check_branch
          %244 = sbr.rel (%p242) target = $region16
        $region15: #{csp_res_stage_forward.5} parent=11 // pred_region
          _
        $region16: #{csp_res_stage_forward.5} parent=11 // pred_fallthru
          _
        // Predicated region
        $region17: #{csp_res_stage_forward.5} parent=11 // pred_check
          %p245 = pneg %p178
        $region18: #{csp_res_stage_forward.5} parent=11 // pred_check_branch
          %247 = sbr.rel (%p245) target = $region20
        $region19: #{csp_res_stage_forward.5} parent=11 // pred_region
          _
        $region20: #{csp_res_stage_forward.5} parent=11 // pred_fallthru
          _
        // Predicated region
        $region21: #{csp_res_stage_forward.5} parent=11 // pred_check
          %p248 = pneg %p199
        $region22: #{csp_res_stage_forward.5} parent=11 // pred_check_branch
          %250 = sbr.rel (%p248) target = $region24
        $region23: #{csp_res_stage_forward.5} parent=11 // pred_region
          _
        $region24: #{csp_res_stage_forward.5} parent=11 // pred_fallthru
          _
      $region12: #{csp_res_stage_forward.5} parent=5 // pred_fallthru
        _
      %p251 = scmp.lt.s32.totalorder %s16, 2
      // Predicated region
      $region25: #{csp_res_stage_forward.5} parent=5 // pred_check
        %p252 = pneg %p251
      $region26: #{csp_res_stage_forward.5} parent=5 // pred_check_branch
        %254 = sbr.rel (%p252) target = $region28
      $region27: #{csp_res_stage_forward.5} parent=5 // pred_region
        // Predicated region
        $region29: #{csp_res_stage_forward.5} parent=27 // pred_check
          %p255 = pneg %p50
        $region30: #{csp_res_stage_forward.5} parent=27 // pred_check_branch
          %257 = sbr.rel (%p255) target = $region32
        $region31: #{csp_res_stage_forward.5} parent=27 // pred_region
          %s258 = smul.u32 8, %s24
          %p259 = scmp.lt.s32.totalorder %s23, 1
          %s260 = scalar_select %p259, %s23, 1
          %p261 = scmp.lt.s32.totalorder %s258, 7
          %s262 = scalar_select %p261, %s258, 7
          %s263 = smul.addr %s260, 8
          %s264 = sadd.s32 %s262, %s263
          %s265 = smul.addr %s264, 8
          %s266 = scalar_lea.vmem %s0, %s265
          %s267 = smul.u32 8, %s24
        $region32: #{csp_res_stage_forward.5} parent=27 // pred_fallthru
          _
        // Predicated region
        $region33: #{csp_res_stage_forward.5} parent=27 // pred_check
          %p268 = pneg %p78
        $region34: #{csp_res_stage_forward.5} parent=27 // pred_check_branch
          %270 = sbr.rel (%p268) target = $region36
        $region35: #{csp_res_stage_forward.5} parent=27 // pred_region
          %s271 = smul.u32 8, %s24
          %p272 = scmp.lt.s32.totalorder %s23, 1
          %s273 = scalar_select %p272, %s23, 1
          %p274 = scmp.lt.s32.totalorder %s271, 7
          %s275 = scalar_select %p274, %s271, 7
          %s276 = smul.addr %s273, 8
          %s277 = sadd.s32 %s275, %s276
          %s278 = smul.addr %s277, 8
          %s279 = scalar_lea.vmem %s1, %s278
          %s280 = smul.u32 8, %s24
        $region36: #{csp_res_stage_forward.5} parent=27 // pred_fallthru
          _
        // Predicated region
        $region37: #{csp_res_stage_forward.5} parent=27 // pred_check
          %p281 = pneg %p104
        $region38: #{csp_res_stage_forward.5} parent=27 // pred_check_branch
          %283 = sbr.rel (%p281) target = $region40
        $region39: #{csp_res_stage_forward.5} parent=27 // pred_region
          %p284 = scmp.lt.s32.totalorder %s23, 1
          %s285 = scalar_select %p284, %s23, 1
          %s286 = scalar_lea.vmem %s2, %s285
        $region40: #{csp_res_stage_forward.5} parent=27 // pred_fallthru
          _
        // Predicated region
        $region41: #{csp_res_stage_forward.5} parent=27 // pred_check
          %p287 = pneg %p130
        $region42: #{csp_res_stage_forward.5} parent=27 // pred_check_branch
          %289 = sbr.rel (%p287) target = $region44
        $region43: #{csp_res_stage_forward.5} parent=27 // pred_region
          %p290 = scmp.lt.s32.totalorder %s23, 1
          %s291 = scalar_select %p290, %s23, 1
          %s292 = scalar_lea.vmem %s3, %s291
        $region44: #{csp_res_stage_forward.5} parent=27 // pred_fallthru
          _
      $region28: #{csp_res_stage_forward.5} parent=5 // pred_fallthru
        _
      %p293 = scmp.le.s32.totalorder 1, %s16
      %p294 = scmp.lt.s32.totalorder %s16, 3
      %p295 = pnand %p293, %p294
      %p296 = pneg %p295
      // Predicated region
      $region45: #{csp_res_stage_forward.5} parent=5 // pred_check
        _
      $region46: #{csp_res_stage_forward.5} parent=5 // pred_check_branch
        %298 = sbr.rel (%p295) target = $region48
      $region47: #{csp_res_stage_forward.5} parent=5 // pred_region
        %s299 = ssub.s32 %s16, 1
        %s300 = smul.u32 8, %s26
        %p301 = scmp.lt.s32.totalorder %s25, 1
        %s302 = scalar_select %p301, %s25, 1
        %p303 = scmp.lt.s32.totalorder %s300, 7
        %s304 = scalar_select %p303, %s300, 7
        %s305 = smul.addr %s302, 8
        %s306 = sadd.s32 %s304, %s305
        %s307 = smul.addr %s306, 8
        %s308 = scalar_lea.vmem %s0, %s307
        %p309 = pneg %p56
        %p310 = pneg %p53
        %s311 = smul.u32 8, %s26
        %p312 = scmp.lt.s32.totalorder %s25, 1
        %s313 = scalar_select %p312, %s25, 1
        %p314 = scmp.lt.s32.totalorder %s311, 7
        %s315 = scalar_select %p314, %s311, 7
        %s316 = smul.addr %s313, 8
        %s317 = sadd.s32 %s315, %s316
        %s318 = smul.addr %s317, 8
        %s319 = scalar_lea.vmem %s1, %s318
        %p320 = pneg %p84
        %p321 = pneg %p81
        %p322 = scmp.lt.s32.totalorder %s25, 1
        %s323 = scalar_select %p322, %s25, 1
        %s324 = scalar_lea.vmem %s2, %s323
        %p325 = pneg %p110
        %p326 = pneg %p107
        %p327 = scmp.lt.s32.totalorder %s25, 1
        %s328 = scalar_select %p327, %s25, 1
        %s329 = scalar_lea.vmem %s3, %s328
        %p330 = pneg %p136
        %p331 = pneg %p133
        %p332 = pneg %p157
        %p333 = pneg %p154
        %p334 = pneg %p178
        %p335 = pneg %p175
        %p336 = pneg %p199
        %p337 = pneg %p196
        %p338 = pneg %p227
        %p339 = pneg %p224
        %s340 = sand.u32 %s214, 1
        %s341 = scalar_lea.sflag [#allocation3], %s340
        %s342 = sand.u32 %s214, 1
        %s343 = smul.addr %s342, 64
        %s344 = scalar_lea.vmem [#allocation2], %s343
        %s345 = smul.u32 8, %s26
        %p346 = scmp.lt.s32.totalorder %s25, 1
        %s347 = scalar_select %p346, %s25, 1
        %p348 = scmp.lt.s32.totalorder %s345, 7
        %s349 = scalar_select %p348, %s345, 7
        %s350 = smul.addr %s347, 8
        %s351 = sadd.s32 %s349, %s350
        %s352 = smul.addr %s351, 8
        %s353 = scalar_lea.vmem %s0, %s352
        %s354 = smul.u32 8, %s26
        %s355 = smul.u32 8, %s26
        %p356 = scmp.lt.s32.totalorder %s25, 1
        %s357 = scalar_select %p356, %s25, 1
        %p358 = scmp.lt.s32.totalorder %s355, 7
        %s359 = scalar_select %p358, %s355, 7
        %s360 = smul.addr %s357, 8
        %s361 = sadd.s32 %s359, %s360
        %s362 = smul.addr %s361, 8
        %s363 = scalar_lea.vmem %s1, %s362
        %s364 = smul.u32 8, %s26
        %p365 = scmp.lt.s32.totalorder %s25, 1
        %s366 = scalar_select %p365, %s25, 1
        %s367 = scalar_lea.vmem %s2, %s366
        %p368 = scmp.lt.s32.totalorder %s25, 1
        %s369 = scalar_select %p368, %s25, 1
        %s370 = scalar_lea.vmem %s3, %s369
        %s371 = smul.u32 8, %s26
        %v372 = vld [vmem:[%s353] sm:$0xff]
        %v373 = vld [vmem:[%s353 + $0x8] sm:$0xff]
        %v374 = vld [vmem:[%s353 + $0x10] sm:$0xff]
        %v375 = vld [vmem:[%s353 + $0x18] sm:$0xff]
        %v376 = vld [vmem:[%s353 + $0x20] sm:$0xff]
        %v377 = vld [vmem:[%s353 + $0x28] sm:$0xff]
        %v378 = vld [vmem:[%s353 + $0x30] sm:$0xff]
        %v379 = vld [vmem:[%s353 + $0x38] sm:$0xff]
        %v380 = vld [vmem:[%s367] sm:$0x1]
        %v382 = vperm.slane %v380, 0
        %v384 = vmul.f32 %v372, %v382
        %v385 = vmul.f32 %v373, %v382
        %v386 = vmul.f32 %v374, %v382
        %v387 = vmul.f32 %v375, %v382
        %v388 = vmul.f32 %v376, %v382
        %v389 = vmul.f32 %v377, %v382
        %v390 = vmul.f32 %v378, %v382
        %v391 = vmul.f32 %v379, %v382
        %v392 = vld [vmem:[%s363] sm:$0xff]
        %v393 = vld [vmem:[%s363 + $0x8] sm:$0xff]
        %v394 = vld [vmem:[%s363 + $0x10] sm:$0xff]
        %v395 = vld [vmem:[%s363 + $0x18] sm:$0xff]
        %v396 = vld [vmem:[%s363 + $0x20] sm:$0xff]
        %v397 = vld [vmem:[%s363 + $0x28] sm:$0xff]
        %v398 = vld [vmem:[%s363 + $0x30] sm:$0xff]
        %v399 = vld [vmem:[%s363 + $0x38] sm:$0xff]
        %v400 = vld [vmem:[%s370] sm:$0x1]
        %v402 = vperm.slane %v400, 0
        %v404 = vmul.f32 %v392, %v402
        %v405 = vmul.f32 %v393, %v402
        %v406 = vmul.f32 %v394, %v402
        %v407 = vmul.f32 %v395, %v402
        %v408 = vmul.f32 %v396, %v402
        %v409 = vmul.f32 %v397, %v402
        %v410 = vmul.f32 %v398, %v402
        %v411 = vmul.f32 %v399, %v402
        %v412 = vld [vmem:[%s4] sm:$0xff]
        %v413 = vld [vmem:[%s4 + $0x8] sm:$0xf]
        %v414 = vld [vmem:[%s5] sm:$0xff]
        %v415 = vld [vmem:[%s5 + $0x8] sm:$0xf]
        %vm416 = vcmask 97280
        %v418 = vsel %vm416, %v404, 0
        %v421 = vsel %vm416, %v405, 0
        %v424 = vsel %vm416, %v406, 0
        %v427 = vsel %vm416, %v407, 0
        %v430 = vsel %vm416, %v408, 0
        %v433 = vsel %vm416, %v409, 0
        %v436 = vsel %vm416, %v410, 0
        %v439 = vsel %vm416, %v411, 0
        %vm441 = vcmask 1043456
        %v443 = vsel %vm441, %v415, 0
        %445 = vmatpush.msra.mxu0 0.0
        %446 = vmatpush.msra.mxu0 0.0
        %447 = vmatpush.msra.mxu0 0.0
        %448 = vmatpush.msra.mxu0 0.0
        %449 = vmatpush.msra.mxu0 0.0
        %450 = vmatpush.msra.mxu0 0.0
        %451 = vmatpush.msra.mxu0 0.0
        %452 = vmatpush.msra.mxu0 0.0
        %453 = vmatpush.msra.mxu0 0.0
        %454 = vmatpush.msra.mxu0 0.0
        %455 = vmatpush.msra.mxu0 0.0
        %456 = vmatpush.msra.mxu0 0.0
        %457 = vmatpush.msra.mxu0 0.0
        %458 = vmatpush.msra.mxu0 0.0
        %459 = vmatpush.msra.mxu0 %v443
        %460 = vmatpush.msra.mxu0 %v414
        %461 = vmatmul.f32.gmra.mxu0 %v418
        %v462 = vpop.f32.mrf.mxu0
        %v463 = vadd.f32 0.0, %v462
        %464 = vmatmul.f32.gmra.mxu0 %v421
        %v465 = vpop.f32.mrf.mxu0
        %v466 = vadd.f32 0.0, %v465
        %467 = vmatmul.f32.gmra.mxu0 %v424
        %v468 = vpop.f32.mrf.mxu0
        %v469 = vadd.f32 0.0, %v468
        %470 = vmatmul.f32.gmra.mxu0 %v427
        %v471 = vpop.f32.mrf.mxu0
        %v472 = vadd.f32 0.0, %v471
        %473 = vmatmul.f32.gmra.mxu0 %v430
        %v474 = vpop.f32.mrf.mxu0
        %v475 = vadd.f32 0.0, %v474
        %476 = vmatmul.f32.gmra.mxu0 %v433
        %v477 = vpop.f32.mrf.mxu0
        %v478 = vadd.f32 0.0, %v477
        %479 = vmatmul.f32.gmra.mxu0 %v436
        %v480 = vpop.f32.mrf.mxu0
        %v481 = vadd.f32 0.0, %v480
        %482 = vmatmul.f32.gmra.mxu0 %v439
        %v483 = vpop.f32.mrf.mxu0
        %v484 = vadd.f32 0.0, %v483
        %485 = vdwg.mxu0
        %v487 = vsel %vm416, %v384, 0
        %v490 = vsel %vm416, %v385, 0
        %v493 = vsel %vm416, %v386, 0
        %v496 = vsel %vm416, %v387, 0
        %v499 = vsel %vm416, %v388, 0
        %v502 = vsel %vm416, %v389, 0
        %v505 = vsel %vm416, %v390, 0
        %v508 = vsel %vm416, %v391, 0
        %v511 = vsel %vm441, %v413, 0
        %513 = vmatpush.msra.mxu0 0.0
        %514 = vmatpush.msra.mxu0 0.0
        %515 = vmatpush.msra.mxu0 0.0
        %516 = vmatpush.msra.mxu0 0.0
        %517 = vmatpush.msra.mxu0 0.0
        %518 = vmatpush.msra.mxu0 0.0
        %519 = vmatpush.msra.mxu0 0.0
        %520 = vmatpush.msra.mxu0 0.0
        %521 = vmatpush.msra.mxu0 0.0
        %522 = vmatpush.msra.mxu0 0.0
        %523 = vmatpush.msra.mxu0 0.0
        %524 = vmatpush.msra.mxu0 0.0
        %525 = vmatpush.msra.mxu0 0.0
        %526 = vmatpush.msra.mxu0 0.0
        %527 = vmatpush.msra.mxu0 %v511
        %528 = vmatpush.msra.mxu0 %v412
        %529 = vmatmul.f32.gmra.mxu0 %v487
        %v530 = vpop.f32.mrf.mxu0
        %v531 = vadd.f32 %v463, %v530
        %532 = vmatmul.f32.gmra.mxu0 %v490
        %v533 = vpop.f32.mrf.mxu0
        %v534 = vadd.f32 %v466, %v533
        %535 = vmatmul.f32.gmra.mxu0 %v493
        %v536 = vpop.f32.mrf.mxu0
        %v537 = vadd.f32 %v469, %v536
        %538 = vmatmul.f32.gmra.mxu0 %v496
        %v539 = vpop.f32.mrf.mxu0
        %v540 = vadd.f32 %v472, %v539
        %541 = vmatmul.f32.gmra.mxu0 %v499
        %v542 = vpop.f32.mrf.mxu0
        %v543 = vadd.f32 %v475, %v542
        %544 = vmatmul.f32.gmra.mxu0 %v502
        %v545 = vpop.f32.mrf.mxu0
        %v546 = vadd.f32 %v478, %v545
        %547 = vmatmul.f32.gmra.mxu0 %v505
        %v548 = vpop.f32.mrf.mxu0
        %v549 = vadd.f32 %v481, %v548
        %550 = vmatmul.f32.gmra.mxu0 %v508
        %v551 = vpop.f32.mrf.mxu0
        %v552 = vadd.f32 %v484, %v551
        %553 = vdwg.mxu0
        %v554 = vld [vmem:[%s6] sm:$0x1]
        %v556 = vperm.slane %v554, 0
        %v558 = vadd.f32 %v531, %v556
        %v559 = vadd.f32 %v534, %v556
        %v560 = vadd.f32 %v537, %v556
        %v561 = vadd.f32 %v540, %v556
        %v562 = vadd.f32 %v543, %v556
        %v563 = vadd.f32 %v546, %v556
        %v564 = vadd.f32 %v549, %v556
        %v565 = vadd.f32 %v552, %v556
        %v566 = vmax.f32 %v558, 0.0
        %v567 = vmax.f32 %v559, 0.0
        %v568 = vmax.f32 %v560, 0.0
        %v569 = vmax.f32 %v561, 0.0
        %v570 = vmax.f32 %v562, 0.0
        %v571 = vmax.f32 %v563, 0.0
        %v572 = vmax.f32 %v564, 0.0
        %v573 = vmax.f32 %v565, 0.0
        %vm574 = vcmask 261120
        %575 = vst.msk [vmem:[%s344] sm:$0xff] %vm574, %v566
        %576 = vst.msk [vmem:[%s344 + $0x8] sm:$0xff] %vm574, %v567
        %577 = vst.msk [vmem:[%s344 + $0x10] sm:$0xff] %vm574, %v568
        %578 = vst.msk [vmem:[%s344 + $0x18] sm:$0xff] %vm574, %v569
        %579 = vst.msk [vmem:[%s344 + $0x20] sm:$0xff] %vm574, %v570
        %580 = vst.msk [vmem:[%s344 + $0x28] sm:$0xff] %vm574, %v571
        %581 = vst.msk [vmem:[%s344 + $0x30] sm:$0xff] %vm574, %v572
        %582 = vst.msk [vmem:[%s344 + $0x38] sm:$0xff] %vm574, %v573
        %s583 = sand.u32 %s214, 1
        %s584 = scalar_lea.sflag [#allocation3], %s583
        %s585 = sand.u32 %s214, 1
        %s586 = smul.addr %s585, 64
        %s587 = scalar_lea.vmem [#allocation2], %s586
        // Predicated region
        $region49: #{csp_res_stage_forward.5} parent=47 // pred_check
          %p588 = pneg %p224
        $region50: #{csp_res_stage_forward.5} parent=47 // pred_check_branch
          %590 = sbr.rel (%p588) target = $region52
        $region51: #{csp_res_stage_forward.5} parent=47 // pred_region
          %s591 = smul.u32 8, %s26
          %593 = vsyncadd %s584, 0
          %s594 = smul.addr %s25, 8
          %s595 = sadd.s32 %s591, %s594
          %s596 = smul.addr %s595, 8
          %s597 = scalar_lea.hbm %s7, %s596
          %s598 = sshll.u32 %s587, 4
          %s599 = int_to_ptr.vmem [resolvable:$true] %s598
          %s600 = sshll.u32 %s597, 4
          %s601 = int_to_ptr.hbm [resolvable:$true] %s600
          %606 = dma.vmem_to_hbm [thread:$0]  %s599, 1024, %s601, %s584, 128, 128, 8
        $region52: #{csp_res_stage_forward.5} parent=47 // pred_fallthru
          _
      $region48: #{csp_res_stage_forward.5} parent=5 // pred_fallthru
        _
      %p607 = scmp.le.s32.totalorder 2, %s16
      // Predicated region
      $region53: #{csp_res_stage_forward.5} parent=5 // pred_check
        %p608 = pneg %p607
      $region54: #{csp_res_stage_forward.5} parent=5 // pred_check_branch
        %610 = sbr.rel (%p608) target = $region56
      $region55: #{csp_res_stage_forward.5} parent=5 // pred_region
        %s611 = ssub.s32 %s16, 2
        // Predicated region
        $region57: #{csp_res_stage_forward.5} parent=55 // pred_check
          %p612 = pneg %p230
        $region58: #{csp_res_stage_forward.5} parent=55 // pred_check_branch
          %614 = sbr.rel (%p612) target = $region60
        $region59: #{csp_res_stage_forward.5} parent=55 // pred_region
          %s615 = sand.u32 %s215, 1
          %s616 = scalar_lea.sflag [#allocation3], %s615
          %s617 = sand.u32 %s215, 1
          %s618 = smul.addr %s617, 64
          %s619 = scalar_lea.vmem [#allocation2], %s618
          %621 = dma.done %s616, 1024
        $region60: #{csp_res_stage_forward.5} parent=55 // pred_fallthru
          _
      $region56: #{csp_res_stage_forward.5} parent=5 // pred_fallthru
        _
    $region6: #{csp_res_stage_forward.5} parent=1 // loop_footer
      %s20 = sadd.s32 1, %s16
    $region7: #{csp_res_stage_forward.5} parent=1 // loop_footer_branch
      %15 = sbr.rel target = $region3
    $region8: #{csp_res_stage_forward.5} parent=1 // loop_exit
      _
    %622 = vsyncpa [#allocation3], 1
    %s623 = scalar_lea.sflag [#allocation3], 1
    %624 = vsyncpa %s623, 1

</llo_original>
